<compile_context>
chip_gen: v7x
topology: tpu7x:2x2x1
jax: 0.10.0
libtpu: 0.0.40
codegen_flags: <defaults>
</compile_context>

<pallas_src>
import jax
import jax.numpy as jnp
from jax.experimental import pallas as pl
from jax.experimental.pallas import tpu as pltpu

LN_EPS = 1e-5      # nn.LayerNorm default
OUT_PAD = 128      # lane-dense output width (columns beyond 2*action_horizon are zero)


def _gelu_tanh(x):
    # tanh-approx GELU: transcendental goes to the EUP slot on TPU.
    return 0.5 * x * (1.0 + jnp.tanh(0.7978845608028654 * (x + 0.044715 * x * x * x)))


def _gelu_exact(x):
    # Reference-only (pure JAX): exact erf GELU, matching nn.GELU() default.
    return 0.5 * x * (1.0 + jax.scipy.special.erf(x * 0.7071067811865476))


def _vf_kernel(x_ref, t_ref, cond_ref, mask_ref,
               wpos_ref, bpos_ref, wtime_ref, btime_ref, wcond_ref, bcond_ref,
               w1_ref, b1_ref, w2_ref, b2_ref, wout_ref, bout_ref,
               out_ref, slab_ref):
    f32 = jnp.float32
    bf16 = jnp.bfloat16
    B = x_ref.shape[0]
    BCH = cond_ref.shape[0]
    L = w1_ref.shape[0]
    rows = BCH + 2 * B
    rows_pad = slab_ref.shape[0]

    # ---- input embeddings: MXU consumes bf16 operands, accumulates f32 -------------
    pos = jnp.dot(x_ref[...].astype(bf16), wpos_ref[...],
                  preferred_element_type=f32) + bpos_ref[...]
    tim = jnp.dot(t_ref[...].astype(bf16), wtime_ref[...],
                  preferred_element_type=f32) + btime_ref[...]
    # Mask arrives pre-broadcast as [BCH, T]; multiply is exact (0/1) in f32.
    masked = (cond_ref[...] * mask_ref[...]).astype(bf16)
    cnd = jnp.dot(masked, wcond_ref[...],
                  preferred_element_type=f32) + bcond_ref[...]

    # ---- token slab: three contiguous block stores ----------------------------------
    # cond block at [0, BCH) (sublane-aligned when BCH % 8 == 0, i.e. unmasked vst),
    # pos at [BCH, BCH+B), time at [BCH+B, BCH+2B).  Only the padding tail is zeroed.
    slab_ref[pl.ds(0, BCH), :] = cnd
    slab_ref[pl.ds(BCH, B), :] = pos
    slab_ref[pl.ds(BCH + B, B), :] = tim
    if rows_pad > rows:
        slab_ref[pl.ds(rows, rows_pad - rows), :] = jnp.zeros(
            (rows_pad - rows, slab_ref.shape[1]), f32)

    # ---- single pass: L x [LN -> Linear(E,4E) -> GELU -> Linear(4E,E)], out_proj ----
    # LayerNorm gamma/beta folded into w1/b1 at init; variance via E[x^2]-mu^2 so the
    # two lane reductions are independent.  Dropout = identity (eval mode).
    h = slab_ref[...]
    b1 = b1_ref[...]
    b2 = b2_ref[...]
    for l in range(L):
        mu = jnp.mean(h, axis=-1, keepdims=True)
        ms = jnp.mean(h * h, axis=-1, keepdims=True)
        hn = (h - mu) * jax.lax.rsqrt(ms - mu * mu + LN_EPS)
        z = jnp.dot(hn.astype(bf16), w1_ref[l],
                    preferred_element_type=f32) + b1[l:l + 1, :]
        z = _gelu_tanh(z)
        h = jnp.dot(z.astype(bf16), w2_ref[l],
                    preferred_element_type=f32) + b2[l:l + 1, :]

    out_ref[...] = jnp.dot(h.astype(bf16), wout_ref[...],
                           preferred_element_type=f32) + bout_ref[...]


def init_params(key, *, dim, condition_dim, embed_dim, num_layers, time_horizon, action_horizon):
    E = embed_dim
    out_dim = 2 * action_horizon

    def linear(k, fan_in, fan_out):
        kw, kb = jax.random.split(k)
        bound = 1.0 / float(fan_in) ** 0.5
        w = jax.random.uniform(kw, (fan_in, fan_out), jnp.float32, -bound, bound)
        b = jax.random.uniform(kb, (1, fan_out), jnp.float32, -bound, bound)
        return w, b

    keys = jax.random.split(key, 4 + 2 * num_layers)
    w_time, b_time = linear(keys[0], time_horizon, E)
    w_pos, b_pos = linear(keys[1], dim * time_horizon, E)
    w_cond, b_cond = linear(keys[2], condition_dim * time_horizon, E)
    w_out, b_out = linear(keys[3], E, out_dim)

    w1s, b1s, w2s, b2s = [], [], [], []
    for l in range(num_layers):
        w1, b1 = linear(keys[4 + 2 * l], E, 4 * E)
        w2, b2 = linear(keys[5 + 2 * l], 4 * E, E)
        w1s.append(w1); b1s.append(b1); w2s.append(w2); b2s.append(b2)

    w1 = jnp.stack(w1s)                 # (L, E, 4E)
    b1 = jnp.concatenate(b1s, axis=0)   # (L, 4E)
    w2 = jnp.stack(w2s)                 # (L, 4E, E)
    b2 = jnp.concatenate(b2s, axis=0)   # (L, E)
    ln_g = jnp.ones((num_layers, E), jnp.float32)
    ln_b = jnp.zeros((num_layers, E), jnp.float32)

    # Fold LayerNorm affine into the first MLP matmul:
    #   (hn*g + b) @ w1  ==  hn @ (diag(g) @ w1) + (b @ w1)
    w1_fold = ln_g[:, :, None] * w1
    b1_fold = jnp.einsum("le,lef->lf", ln_b, w1) + b1

    # Lane-dense out_proj: zero-pad output columns to OUT_PAD at init (no per-call pad).
    w_out_pad = jnp.zeros((E, OUT_PAD), jnp.float32).at[:, :out_dim].set(w_out)
    b_out_pad = jnp.zeros((1, OUT_PAD), jnp.float32).at[:, :out_dim].set(b_out)

    bf16 = jnp.bfloat16
    return dict(
        # f32 originals (used by the exact-erf torch-equivalent reference)
        w_time=w_time, b_time=b_time, w_pos=w_pos, b_pos=b_pos,
        w_cond=w_cond, b_cond=b_cond, w_out=w_out, b_out=b_out,
        ln_g=ln_g, ln_b=ln_b, w1=w1, b1=b1, w2=w2, b2=b2,
        # kernel-side variants: bf16 matmul weights, LN folded, lane-dense out_proj
        w_time_bf=w_time.astype(bf16), w_pos_bf=w_pos.astype(bf16),
        w_cond_bf=w_cond.astype(bf16),
        w1_bf=w1_fold.astype(bf16), b1_fold=b1_fold,
        w2_bf=w2.astype(bf16),
        w_out_pad_bf=w_out_pad.astype(bf16), b_out_pad=b_out_pad,
    )


def vector_field_net_forward(params, x, t, condition, condition_mask):
    B, C, H, T = condition.shape
    E = params["w_pos"].shape[1]
    L = params["w1_bf"].shape[0]
    out_dim = params["w_out"].shape[1]
    out_pad = params["w_out_pad_bf"].shape[1]
    CH = C * H
    BCH = B * CH
    S = 2 + CH
    rows = BCH + 2 * B
    rows_pad = ((rows + 7) // 8) * 8

    # Free reshapes; the literal-torch mask broadcast (mask indexed by condition dim-1)
    # is done here (~4 KiB, fused by XLA) instead of a selection matmul in the kernel.
    x2 = x.reshape(B, -1).astype(jnp.float32)                      # [B, dim*time_horizon]
    t2 = t.reshape(B, -1).astype(jnp.float32)                      # [B, time_horizon]
    cond2 = condition.reshape(BCH, T).astype(jnp.float32)          # [B*C*H, T]
    mask2 = jnp.broadcast_to(condition_mask[:, :, None, :].astype(jnp.float32),
                             (B, C, H, T)).reshape(BCH, T)         # [B*C*H, T]

    operands = (
        x2, t2, cond2, mask2,
        params["w_pos_bf"], params["b_pos"],
        params["w_time_bf"], params["b_time"],
        params["w_cond_bf"], params["b_cond"],
        params["w1_bf"], params["b1_fold"],
        params["w2_bf"], params["b2"],
        params["w_out_pad_bf"], params["b_out_pad"],
    )

    def full_spec(a):
        n = a.ndim
        return pl.BlockSpec(a.shape, lambda i, _n=n: (0,) * _n)

    # Advisory cost estimate so XLA schedules the tiny custom call sensibly.
    flops = 2 * (B * x2.shape[1] * E + B * t2.shape[1] * E + BCH * T * E
                 + L * (rows_pad * E * 4 * E + rows_pad * 4 * E * E)
                 + rows_pad * E * out_pad)
    transcendentals = L * rows_pad * 4 * E
    bytes_accessed = sum(int(a.size) * a.dtype.itemsize for a in operands) \
        + rows_pad * out_pad * 4

    # Shapes are tiny (<1 MiB total): single grid step, every operand resident as one
    # full VMEM block.  If B / C*H grow to a few hundred rows, tile the token-row axis
    # with a BlockSpec and mark it "parallel" (v7x second TC) instead of this pattern.
    # If this forward is called repeatedly (ODE steps), stack steps into the row axis
    # of ONE call — per-pallas_call dispatch dominates at this size.
    out = pl.pallas_call(
        _vf_kernel,
        grid=(1,),
        in_specs=[full_spec(a) for a in operands],
        out_specs=pl.BlockSpec((rows_pad, out_pad), lambda i: (0, 0)),
        out_shape=jax.ShapeDtypeStruct((rows_pad, out_pad), jnp.float32),
        scratch_shapes=[pltpu.VMEM((rows_pad, E), jnp.float32)],
        compiler_params=pltpu.CompilerParams(dimension_semantics=("arbitrary",)),
        cost_estimate=pl.CostEstimate(flops=flops, transcendentals=transcendentals,
                                      bytes_accessed=bytes_accessed),
    )(*operands)

    # Cheap reorder of the tiny output back to batch-major token order [pos, time, cond...].
    cond_out = out[:BCH, :out_dim].reshape(B, CH, out_dim)
    pos_out = out[BCH:BCH + B, :out_dim].reshape(B, 1, out_dim)
    tim_out = out[BCH + B:BCH + 2 * B, :out_dim].reshape(B, 1, out_dim)
    return jnp.concatenate([pos_out, tim_out, cond_out], axis=1)     # [B, S, out_dim]


def reference_forward_exact(params, x, t, condition, condition_mask):
    # Pure-JAX f32 reference mirroring the torch module (standard LN, exact-erf GELU).
    B, C, H, T = condition.shape
    masked = (condition * condition_mask[..., None, :]).reshape(B, -1, T)
    cnd = masked @ params["w_cond"] + params["b_cond"]
    pos = x.reshape(B, -1) @ params["w_pos"] + params["b_pos"]
    tim = t.reshape(B, -1) @ params["w_time"] + params["b_time"]
    h = jnp.concatenate([pos[:, None, :], tim[:, None, :], cnd], axis=1)
    for l in range(params["ln_g"].shape[0]):
        mu = jnp.mean(h, -1, keepdims=True)
        xc = h - mu
        var = jnp.mean(xc * xc, -1, keepdims=True)
        hn = xc * jax.lax.rsqrt(var + LN_EPS) * params["ln_g"][l] + params["ln_b"][l]
        z = _gelu_exact(hn @ params["w1"][l] + params["b1"][l])
        h = z @ params["w2"][l] + params["b2"][l]
    return h @ params["w_out"] + params["b_out"]


def reference_forward_matched(params, x, t, condition, condition_mask):
    # Pure-JAX reference using the SAME numerics as the kernel (bf16 matmul operands,
    # f32 accumulation, folded LN, E[x^2]-mu^2 variance, tanh GELU) — plumbing check.
    bf16, f32 = jnp.bfloat16, jnp.float32
    B, C, H, T = condition.shape
    masked = (condition * condition_mask[..., None, :]).reshape(B, -1, T)
    cnd = jnp.dot(masked.astype(bf16), params["w_cond_bf"],
                  preferred_element_type=f32) + params["b_cond"]
    pos = jnp.dot(x.reshape(B, -1).astype(bf16), params["w_pos_bf"],
                  preferred_element_type=f32) + params["b_pos"]
    tim = jnp.dot(t.reshape(B, -1).astype(bf16), params["w_time_bf"],
                  preferred_element_type=f32) + params["b_time"]
    h = jnp.concatenate([pos[:, None, :], tim[:, None, :], cnd], axis=1)
    out_dim = params["w_out"].shape[1]
    for l in range(params["w1_bf"].shape[0]):
        mu = jnp.mean(h, -1, keepdims=True)
        ms = jnp.mean(h * h, -1, keepdims=True)
        hn = (h - mu) * jax.lax.rsqrt(ms - mu * mu + LN_EPS)
        z = _gelu_tanh(jnp.dot(hn.astype(bf16), params["w1_bf"][l],
                               preferred_element_type=f32) + params["b1_fold"][l])
        h = jnp.dot(z.astype(bf16), params["w2_bf"][l],
                    preferred_element_type=f32) + params["b2"][l]
    out = jnp.dot(h.astype(bf16), params["w_out_pad_bf"],
                  preferred_element_type=f32) + params["b_out_pad"]
    return out[..., :out_dim]


if __name__ == "__main__":
    # Small hyperparameters consistent with the module's structure.
    dim = 4
    condition_dim = 4
    embed_dim = 32
    num_layers = 4
    time_horizon = 8
    action_horizon = 5
    B = 2

    key = jax.random.PRNGKey(0)
    kp, kx, kt, kc, km = jax.random.split(key, 5)

    params = init_params(
        kp, dim=dim, condition_dim=condition_dim, embed_dim=embed_dim,
        num_layers=num_layers, time_horizon=time_horizon, action_horizon=action_horizon)

    # Shapes implied by forward():
    #   x.view(B,-1) -> pos_embed(dim*time_horizon)   : x [B, dim, time_horizon]
    #   t.view(B,-1) -> time_mlp(time_horizon)        : t [B, 1, time_horizon]
    #   condition last dim T == condition_dim*time_horizon; the literal torch mask
    #   broadcast requires condition.shape[1] == condition_mask.shape[1]:
    #     condition [B, 4, 4, T], condition_mask [B, 4, T]
    T = condition_dim * time_horizon
    x = jax.random.normal(kx, (B, dim, time_horizon), jnp.float32)
    t = jax.random.normal(kt, (B, 1, time_horizon), jnp.float32)
    condition = jax.random.normal(kc, (B, 4, 4, T), jnp.float32)
    condition_mask = (jax.random.uniform(km, (B, 4, T)) > 0.3).astype(jnp.float32)

    out = vector_field_net_forward(params, x, t, condition, condition_mask)
    out = jax.block_until_ready(out)

    assert out.shape == (B, 2 + 4 * 4, 2 * action_horizon), out.shape

    # Tight plumbing check: identical numerics (bf16 matmuls, folded LN, tanh GELU).
    ref_m = reference_forward_matched(params, x, t, condition, condition_mask)
    err_m = float(jnp.max(jnp.abs(out - ref_m)))
    assert jnp.allclose(out, ref_m, atol=5e-3, rtol=5e-3), err_m

    # Loose semantic check vs f32 / exact-erf GELU torch-equivalent reference
    # (deviation sources: bf16 MXU operands + tanh-GELU approximation).
    ref_e = reference_forward_exact(params, x, t, condition, condition_mask)
    err_e = float(jnp.max(jnp.abs(out - ref_e)))
    assert jnp.allclose(out, ref_e, atol=7.5e-2, rtol=5e-2), err_e

    print("KERNEL_OK")
</pallas_src>

<mosaic_0001>
module attributes {stable_mosaic.version = 11 : i64} {
  func.func @_vf_kernel(%arg0: i32, %arg1: memref<2x32xf32, #tpu.memory_space<vmem>>, %arg2: memref<2x8xf32, #tpu.memory_space<vmem>>, %arg3: memref<32x32xf32, #tpu.memory_space<vmem>>, %arg4: memref<32x32xf32, #tpu.memory_space<vmem>>, %arg5: memref<32x32xbf16, #tpu.memory_space<vmem>>, %arg6: memref<1x32xf32, #tpu.memory_space<vmem>>, %arg7: memref<8x32xbf16, #tpu.memory_space<vmem>>, %arg8: memref<1x32xf32, #tpu.memory_space<vmem>>, %arg9: memref<32x32xbf16, #tpu.memory_space<vmem>>, %arg10: memref<1x32xf32, #tpu.memory_space<vmem>>, %arg11: memref<4x32x128xbf16, #tpu.memory_space<vmem>>, %arg12: memref<4x128xf32, #tpu.memory_space<vmem>>, %arg13: memref<4x128x32xbf16, #tpu.memory_space<vmem>>, %arg14: memref<4x32xf32, #tpu.memory_space<vmem>>, %arg15: memref<32x128xbf16, #tpu.memory_space<vmem>>, %arg16: memref<1x128xf32, #tpu.memory_space<vmem>>, %arg17: memref<40x128xf32, #tpu.memory_space<vmem>>, %arg18: memref<40x32xf32, #tpu.memory_space<vmem>>) attributes {dimension_semantics = [#tpu.dimension_semantics<arbitrary>], iteration_bounds = array<i64: 1>, scalar_prefetch = 0 : i64, scratch_operands = 1 : i64, tpu.core_type = #tpu.core_type<tc>, window_params = [{pipeline_mode = #tpu.pipeline_mode<synchronous>, transform_indices = @transform_0, window_bounds = array<i64: 2, 32>}, {pipeline_mode = #tpu.pipeline_mode<synchronous>, transform_indices = @transform_1, window_bounds = array<i64: 2, 8>}, {pipeline_mode = #tpu.pipeline_mode<synchronous>, transform_indices = @transform_2, window_bounds = array<i64: 32, 32>}, {pipeline_mode = #tpu.pipeline_mode<synchronous>, transform_indices = @transform_3, window_bounds = array<i64: 32, 32>}, {pipeline_mode = #tpu.pipeline_mode<synchronous>, transform_indices = @transform_4, window_bounds = array<i64: 32, 32>}, {pipeline_mode = #tpu.pipeline_mode<synchronous>, transform_indices = @transform_5, window_bounds = array<i64: 1, 32>}, {pipeline_mode = #tpu.pipeline_mode<synchronous>, transform_indices = @transform_6, window_bounds = array<i64: 8, 32>}, {pipeline_mode = #tpu.pipeline_mode<synchronous>, transform_indices = @transform_7, window_bounds = array<i64: 1, 32>}, {pipeline_mode = #tpu.pipeline_mode<synchronous>, transform_indices = @transform_8, window_bounds = array<i64: 32, 32>}, {pipeline_mode = #tpu.pipeline_mode<synchronous>, transform_indices = @transform_9, window_bounds = array<i64: 1, 32>}, {pipeline_mode = #tpu.pipeline_mode<synchronous>, transform_indices = @transform_10, window_bounds = array<i64: 4, 32, 128>}, {pipeline_mode = #tpu.pipeline_mode<synchronous>, transform_indices = @transform_11, window_bounds = array<i64: 4, 128>}, {pipeline_mode = #tpu.pipeline_mode<synchronous>, transform_indices = @transform_12, window_bounds = array<i64: 4, 128, 32>}, {pipeline_mode = #tpu.pipeline_mode<synchronous>, transform_indices = @transform_13, window_bounds = array<i64: 4, 32>}, {pipeline_mode = #tpu.pipeline_mode<synchronous>, transform_indices = @transform_14, window_bounds = array<i64: 32, 128>}, {pipeline_mode = #tpu.pipeline_mode<synchronous>, transform_indices = @transform_15, window_bounds = array<i64: 1, 128>}, {pipeline_mode = #tpu.pipeline_mode<synchronous>, transform_indices = @transform_16, window_bounds = array<i64: 40, 128>}]} {
    %c0 = arith.constant 0 : index
    %c0_0 = arith.constant 0 : index
    %0 = vector.load %arg1[%c0, %c0_0] : memref<2x32xf32, #tpu.memory_space<vmem>>, vector<2x32xf32>
    %1 = arith.truncf %0 : vector<2x32xf32> to vector<2x32xbf16>
    %c0_1 = arith.constant 0 : index
    %c0_2 = arith.constant 0 : index
    %2 = vector.load %arg5[%c0_1, %c0_2] : memref<32x32xbf16, #tpu.memory_space<vmem>>, vector<32x32xbf16>
    %cst = arith.constant dense<0.000000e+00> : vector<2x32xf32>
    %3 = tpu.matmul %1, %2, %cst {dimension_numbers = #tpu.dot_dimension_numbers<[1], [0], [0], [1], [0, 0, 1, 1], [], []>} : vector<2x32xbf16>, vector<32x32xbf16>, vector<2x32xf32> -> vector<2x32xf32>
    %c0_3 = arith.constant 0 : index
    %c0_4 = arith.constant 0 : index
    %4 = vector.load %arg6[%c0_3, %c0_4] : memref<1x32xf32, #tpu.memory_space<vmem>>, vector<1x32xf32>
    %5 = vector.broadcast %4 : vector<1x32xf32> to vector<2x32xf32>
    %6 = arith.addf %3, %5 : vector<2x32xf32>
    %c0_5 = arith.constant 0 : index
    %c0_6 = arith.constant 0 : index
    %7 = vector.load %arg2[%c0_5, %c0_6] : memref<2x8xf32, #tpu.memory_space<vmem>>, vector<2x8xf32>
    %8 = arith.truncf %7 : vector<2x8xf32> to vector<2x8xbf16>
    %c0_7 = arith.constant 0 : index
    %c0_8 = arith.constant 0 : index
    %9 = vector.load %arg7[%c0_7, %c0_8] : memref<8x32xbf16, #tpu.memory_space<vmem>>, vector<8x32xbf16>
    %cst_9 = arith.constant dense<0.000000e+00> : vector<2x32xf32>
    %10 = tpu.matmul %8, %9, %cst_9 {dimension_numbers = #tpu.dot_dimension_numbers<[1], [0], [0], [1], [0, 0, 1, 1], [], []>} : vector<2x8xbf16>, vector<8x32xbf16>, vector<2x32xf32> -> vector<2x32xf32>
    %c0_10 = arith.constant 0 : index
    %c0_11 = arith.constant 0 : index
    %11 = vector.load %arg8[%c0_10, %c0_11] : memref<1x32xf32, #tpu.memory_space<vmem>>, vector<1x32xf32>
    %12 = vector.broadcast %11 : vector<1x32xf32> to vector<2x32xf32>
    %13 = arith.addf %10, %12 : vector<2x32xf32>
    %c0_12 = arith.constant 0 : index
    %c0_13 = arith.constant 0 : index
    %14 = vector.load %arg3[%c0_12, %c0_13] : memref<32x32xf32, #tpu.memory_space<vmem>>, vector<32x32xf32>
    %c0_14 = arith.constant 0 : index
    %c0_15 = arith.constant 0 : index
    %15 = vector.load %arg4[%c0_14, %c0_15] : memref<32x32xf32, #tpu.memory_space<vmem>>, vector<32x32xf32>
    %16 = arith.mulf %14, %15 : vector<32x32xf32>
    %17 = arith.truncf %16 : vector<32x32xf32> to vector<32x32xbf16>
    %c0_16 = arith.constant 0 : index
    %c0_17 = arith.constant 0 : index
    %18 = vector.load %arg9[%c0_16, %c0_17] : memref<32x32xbf16, #tpu.memory_space<vmem>>, vector<32x32xbf16>
    %cst_18 = arith.constant dense<0.000000e+00> : vector<32x32xf32>
    %19 = tpu.matmul %17, %18, %cst_18 {dimension_numbers = #tpu.dot_dimension_numbers<[1], [0], [0], [1], [0, 0, 1, 1], [], []>} : vector<32x32xbf16>, vector<32x32xbf16>, vector<32x32xf32> -> vector<32x32xf32>
    %c0_19 = arith.constant 0 : index
    %c0_20 = arith.constant 0 : index
    %20 = vector.load %arg10[%c0_19, %c0_20] : memref<1x32xf32, #tpu.memory_space<vmem>>, vector<1x32xf32>
    %21 = vector.broadcast %20 : vector<1x32xf32> to vector<32x32xf32>
    %22 = arith.addf %19, %21 : vector<32x32xf32>
    %c0_21 = arith.constant 0 : index
    %c0_22 = arith.constant 0 : index
    %23 = vector.load %arg18[%c0_21, %c0_22] : memref<40x32xf32, #tpu.memory_space<vmem>>, vector<32x32xf32>
    tpu.vector_store %arg18[%c0_21, %c0_22], %22 {strides = array<i32>} : memref<40x32xf32, #tpu.memory_space<vmem>>, vector<32x32xf32>,
    %c32 = arith.constant 32 : index
    %c0_23 = arith.constant 0 : index
    %24 = vector.load %arg18[%c32, %c0_23] : memref<40x32xf32, #tpu.memory_space<vmem>>, vector<2x32xf32>
    tpu.vector_store %arg18[%c32, %c0_23], %6 {strides = array<i32>} : memref<40x32xf32, #tpu.memory_space<vmem>>, vector<2x32xf32>,
    %c34 = arith.constant 34 : index
    %c0_24 = arith.constant 0 : index
    %25 = vector.load %arg18[%c34, %c0_24] : memref<40x32xf32, #tpu.memory_space<vmem>>, vector<2x32xf32>
    tpu.vector_store %arg18[%c34, %c0_24], %13 {strides = array<i32>} : memref<40x32xf32, #tpu.memory_space<vmem>>, vector<2x32xf32>,
    %cst_25 = arith.constant 0.000000e+00 : f32
    %26 = vector.broadcast %cst_25 : f32 to vector<4x32xf32>
    %c36 = arith.constant 36 : index
    %c0_26 = arith.constant 0 : index
    %27 = vector.load %arg18[%c36, %c0_26] : memref<40x32xf32, #tpu.memory_space<vmem>>, vector<4x32xf32>
    tpu.vector_store %arg18[%c36, %c0_26], %26 {strides = array<i32>} : memref<40x32xf32, #tpu.memory_space<vmem>>, vector<4x32xf32>,
    %c0_27 = arith.constant 0 : index
    %c0_28 = arith.constant 0 : index
    %28 = vector.load %arg18[%c0_27, %c0_28] : memref<40x32xf32, #tpu.memory_space<vmem>>, vector<40x32xf32>
    %c0_29 = arith.constant 0 : index
    %c0_30 = arith.constant 0 : index
    %29 = vector.load %arg12[%c0_29, %c0_30] : memref<4x128xf32, #tpu.memory_space<vmem>>, vector<4x128xf32>
    %c0_31 = arith.constant 0 : index
    %c0_32 = arith.constant 0 : index
    %30 = vector.load %arg14[%c0_31, %c0_32] : memref<4x32xf32, #tpu.memory_space<vmem>>, vector<4x32xf32>
    %cst_33 = arith.constant dense<0.000000e+00> : vector<40xf32>
    %31 = vector.multi_reduction <add>, %28, %cst_33 [1] : vector<40x32xf32> to vector<40xf32>
    %32 = vector.shape_cast %31 : vector<40xf32> to vector<40x1xf32>
    %cst_34 = arith.constant 3.200000e+01 : f32
    %33 = vector.broadcast %cst_34 : f32 to vector<40x1xf32>
    %34 = arith.divf %32, %33 : vector<40x1xf32>
    %35 = arith.mulf %28, %28 : vector<40x32xf32>
    %cst_35 = arith.constant dense<0.000000e+00> : vector<40xf32>
    %36 = vector.multi_reduction <add>, %35, %cst_35 [1] : vector<40x32xf32> to vector<40xf32>
    %37 = vector.shape_cast %36 : vector<40xf32> to vector<40x1xf32>
    %cst_36 = arith.constant 3.200000e+01 : f32
    %38 = vector.broadcast %cst_36 : f32 to vector<40x1xf32>
    %39 = arith.divf %37, %38 : vector<40x1xf32>
    %40 = vector.broadcast %34 : vector<40x1xf32> to vector<40x32xf32>
    %41 = arith.subf %28, %40 : vector<40x32xf32>
    %42 = arith.mulf %34, %34 : vector<40x1xf32>
    %43 = arith.subf %39, %42 : vector<40x1xf32>
    %cst_37 = arith.constant 9.99999974E-6 : f32
    %44 = vector.broadcast %cst_37 : f32 to vector<40x1xf32>
    %45 = arith.addf %43, %44 : vector<40x1xf32>
    %46 = math.rsqrt %45 : vector<40x1xf32>
    %47 = vector.broadcast %46 : vector<40x1xf32> to vector<40x32xf32>
    %48 = arith.mulf %41, %47 : vector<40x32xf32>
    %49 = arith.truncf %48 : vector<40x32xf32> to vector<40x32xbf16>
    %c0_38 = arith.constant 0 : index
    %c0_39 = arith.constant 0 : index
    %c0_40 = arith.constant 0 : index
    %50 = vector.load %arg11[%c0_38, %c0_39, %c0_40] : memref<4x32x128xbf16, #tpu.memory_space<vmem>>, vector<1x32x128xbf16>
    %51 = vector.shape_cast %50 : vector<1x32x128xbf16> to vector<32x128xbf16>
    %cst_41 = arith.constant dense<0.000000e+00> : vector<40x128xf32>
    %52 = tpu.matmul %49, %51, %cst_41 {dimension_numbers = #tpu.dot_dimension_numbers<[1], [0], [0], [1], [0, 0, 1, 1], [], []>} : vector<40x32xbf16>, vector<32x128xbf16>, vector<40x128xf32> -> vector<40x128xf32>
    %53 = vector.extract_strided_slice %29 {offsets = [0, 0], sizes = [1, 128], strides = [1, 1]} : vector<4x128xf32> to vector<1x128xf32>
    %54 = vector.broadcast %53 : vector<1x128xf32> to vector<40x128xf32>
    %55 = arith.addf %52, %54 : vector<40x128xf32>
    %cst_42 = arith.constant 5.000000e-01 : f32
    %56 = vector.broadcast %cst_42 : f32 to vector<40x128xf32>
    %57 = arith.mulf %56, %55 : vector<40x128xf32>
    %cst_43 = arith.constant 4.471500e-02 : f32
    %58 = vector.broadcast %cst_43 : f32 to vector<40x128xf32>
    %59 = arith.mulf %58, %55 : vector<40x128xf32>
    %60 = arith.mulf %59, %55 : vector<40x128xf32>
    %61 = arith.mulf %60, %55 : vector<40x128xf32>
    %62 = arith.addf %55, %61 : vector<40x128xf32>
    %cst_44 = arith.constant 0.797884583 : f32
    %63 = vector.broadcast %cst_44 : f32 to vector<40x128xf32>
    %64 = arith.mulf %63, %62 : vector<40x128xf32>
    %65 = math.tanh %64 : vector<40x128xf32>
    %cst_45 = arith.constant 1.000000e+00 : f32
    %66 = vector.broadcast %cst_45 : f32 to vector<40x128xf32>
    %67 = arith.addf %66, %65 : vector<40x128xf32>
    %68 = arith.mulf %57, %67 : vector<40x128xf32>
    %69 = arith.truncf %68 : vector<40x128xf32> to vector<40x128xbf16>
    %c0_46 = arith.constant 0 : index
    %c0_47 = arith.constant 0 : index
    %c0_48 = arith.constant 0 : index
    %70 = vector.load %arg13[%c0_46, %c0_47, %c0_48] : memref<4x128x32xbf16, #tpu.memory_space<vmem>>, vector<1x128x32xbf16>
    %71 = vector.shape_cast %70 : vector<1x128x32xbf16> to vector<128x32xbf16>
    %cst_49 = arith.constant dense<0.000000e+00> : vector<40x32xf32>
    %72 = tpu.matmul %69, %71, %cst_49 {dimension_numbers = #tpu.dot_dimension_numbers<[1], [0], [0], [1], [0, 0, 1, 1], [], []>} : vector<40x128xbf16>, vector<128x32xbf16>, vector<40x32xf32> -> vector<40x32xf32>
    %73 = vector.extract_strided_slice %30 {offsets = [0, 0], sizes = [1, 32], strides = [1, 1]} : vector<4x32xf32> to vector<1x32xf32>
    %74 = vector.broadcast %73 : vector<1x32xf32> to vector<40x32xf32>
    %75 = arith.addf %72, %74 : vector<40x32xf32>
    %cst_50 = arith.constant dense<0.000000e+00> : vector<40xf32>
    %76 = vector.multi_reduction <add>, %75, %cst_50 [1] : vector<40x32xf32> to vector<40xf32>
    %77 = vector.shape_cast %76 : vector<40xf32> to vector<40x1xf32>
    %cst_51 = arith.constant 3.200000e+01 : f32
    %78 = vector.broadcast %cst_51 : f32 to vector<40x1xf32>
    %79 = arith.divf %77, %78 : vector<40x1xf32>
    %80 = arith.mulf %75, %75 : vector<40x32xf32>
    %cst_52 = arith.constant dense<0.000000e+00> : vector<40xf32>
    %81 = vector.multi_reduction <add>, %80, %cst_52 [1] : vector<40x32xf32> to vector<40xf32>
    %82 = vector.shape_cast %81 : vector<40xf32> to vector<40x1xf32>
    %cst_53 = arith.constant 3.200000e+01 : f32
    %83 = vector.broadcast %cst_53 : f32 to vector<40x1xf32>
    %84 = arith.divf %82, %83 : vector<40x1xf32>
    %85 = vector.broadcast %79 : vector<40x1xf32> to vector<40x32xf32>
    %86 = arith.subf %75, %85 : vector<40x32xf32>
    %87 = arith.mulf %79, %79 : vector<40x1xf32>
    %88 = arith.subf %84, %87 : vector<40x1xf32>
    %cst_54 = arith.constant 9.99999974E-6 : f32
    %89 = vector.broadcast %cst_54 : f32 to vector<40x1xf32>
    %90 = arith.addf %88, %89 : vector<40x1xf32>
    %91 = math.rsqrt %90 : vector<40x1xf32>
    %92 = vector.broadcast %91 : vector<40x1xf32> to vector<40x32xf32>
    %93 = arith.mulf %86, %92 : vector<40x32xf32>
    %94 = arith.truncf %93 : vector<40x32xf32> to vector<40x32xbf16>
    %c1 = arith.constant 1 : index
    %c0_55 = arith.constant 0 : index
    %c0_56 = arith.constant 0 : index
    %95 = vector.load %arg11[%c1, %c0_55, %c0_56] : memref<4x32x128xbf16, #tpu.memory_space<vmem>>, vector<1x32x128xbf16>
    %96 = vector.shape_cast %95 : vector<1x32x128xbf16> to vector<32x128xbf16>
    %cst_57 = arith.constant dense<0.000000e+00> : vector<40x128xf32>
    %97 = tpu.matmul %94, %96, %cst_57 {dimension_numbers = #tpu.dot_dimension_numbers<[1], [0], [0], [1], [0, 0, 1, 1], [], []>} : vector<40x32xbf16>, vector<32x128xbf16>, vector<40x128xf32> -> vector<40x128xf32>
    %98 = vector.extract_strided_slice %29 {offsets = [1, 0], sizes = [1, 128], strides = [1, 1]} : vector<4x128xf32> to vector<1x128xf32>
    %99 = vector.broadcast %98 : vector<1x128xf32> to vector<40x128xf32>
    %100 = arith.addf %97, %99 : vector<40x128xf32>
    %cst_58 = arith.constant 5.000000e-01 : f32
    %101 = vector.broadcast %cst_58 : f32 to vector<40x128xf32>
    %102 = arith.mulf %101, %100 : vector<40x128xf32>
    %cst_59 = arith.constant 4.471500e-02 : f32
    %103 = vector.broadcast %cst_59 : f32 to vector<40x128xf32>
    %104 = arith.mulf %103, %100 : vector<40x128xf32>
    %105 = arith.mulf %104, %100 : vector<40x128xf32>
    %106 = arith.mulf %105, %100 : vector<40x128xf32>
    %107 = arith.addf %100, %106 : vector<40x128xf32>
    %cst_60 = arith.constant 0.797884583 : f32
    %108 = vector.broadcast %cst_60 : f32 to vector<40x128xf32>
    %109 = arith.mulf %108, %107 : vector<40x128xf32>
    %110 = math.tanh %109 : vector<40x128xf32>
    %cst_61 = arith.constant 1.000000e+00 : f32
    %111 = vector.broadcast %cst_61 : f32 to vector<40x128xf32>
    %112 = arith.addf %111, %110 : vector<40x128xf32>
    %113 = arith.mulf %102, %112 : vector<40x128xf32>
    %114 = arith.truncf %113 : vector<40x128xf32> to vector<40x128xbf16>
    %c1_62 = arith.constant 1 : index
    %c0_63 = arith.constant 0 : index
    %c0_64 = arith.constant 0 : index
    %115 = vector.load %arg13[%c1_62, %c0_63, %c0_64] : memref<4x128x32xbf16, #tpu.memory_space<vmem>>, vector<1x128x32xbf16>
    %116 = vector.shape_cast %115 : vector<1x128x32xbf16> to vector<128x32xbf16>
    %cst_65 = arith.constant dense<0.000000e+00> : vector<40x32xf32>
    %117 = tpu.matmul %114, %116, %cst_65 {dimension_numbers = #tpu.dot_dimension_numbers<[1], [0], [0], [1], [0, 0, 1, 1], [], []>} : vector<40x128xbf16>, vector<128x32xbf16>, vector<40x32xf32> -> vector<40x32xf32>
    %118 = vector.extract_strided_slice %30 {offsets = [1, 0], sizes = [1, 32], strides = [1, 1]} : vector<4x32xf32> to vector<1x32xf32>
    %119 = vector.broadcast %118 : vector<1x32xf32> to vector<40x32xf32>
    %120 = arith.addf %117, %119 : vector<40x32xf32>
    %cst_66 = arith.constant dense<0.000000e+00> : vector<40xf32>
    %121 = vector.multi_reduction <add>, %120, %cst_66 [1] : vector<40x32xf32> to vector<40xf32>
    %122 = vector.shape_cast %121 : vector<40xf32> to vector<40x1xf32>
    %cst_67 = arith.constant 3.200000e+01 : f32
    %123 = vector.broadcast %cst_67 : f32 to vector<40x1xf32>
    %124 = arith.divf %122, %123 : vector<40x1xf32>
    %125 = arith.mulf %120, %120 : vector<40x32xf32>
    %cst_68 = arith.constant dense<0.000000e+00> : vector<40xf32>
    %126 = vector.multi_reduction <add>, %125, %cst_68 [1] : vector<40x32xf32> to vector<40xf32>
    %127 = vector.shape_cast %126 : vector<40xf32> to vector<40x1xf32>
    %cst_69 = arith.constant 3.200000e+01 : f32
    %128 = vector.broadcast %cst_69 : f32 to vector<40x1xf32>
    %129 = arith.divf %127, %128 : vector<40x1xf32>
    %130 = vector.broadcast %124 : vector<40x1xf32> to vector<40x32xf32>
    %131 = arith.subf %120, %130 : vector<40x32xf32>
    %132 = arith.mulf %124, %124 : vector<40x1xf32>
    %133 = arith.subf %129, %132 : vector<40x1xf32>
    %cst_70 = arith.constant 9.99999974E-6 : f32
    %134 = vector.broadcast %cst_70 : f32 to vector<40x1xf32>
    %135 = arith.addf %133, %134 : vector<40x1xf32>
    %136 = math.rsqrt %135 : vector<40x1xf32>
    %137 = vector.broadcast %136 : vector<40x1xf32> to vector<40x32xf32>
    %138 = arith.mulf %131, %137 : vector<40x32xf32>
    %139 = arith.truncf %138 : vector<40x32xf32> to vector<40x32xbf16>
    %c2 = arith.constant 2 : index
    %c0_71 = arith.constant 0 : index
    %c0_72 = arith.constant 0 : index
    %140 = vector.load %arg11[%c2, %c0_71, %c0_72] : memref<4x32x128xbf16, #tpu.memory_space<vmem>>, vector<1x32x128xbf16>
    %141 = vector.shape_cast %140 : vector<1x32x128xbf16> to vector<32x128xbf16>
    %cst_73 = arith.constant dense<0.000000e+00> : vector<40x128xf32>
    %142 = tpu.matmul %139, %141, %cst_73 {dimension_numbers = #tpu.dot_dimension_numbers<[1], [0], [0], [1], [0, 0, 1, 1], [], []>} : vector<40x32xbf16>, vector<32x128xbf16>, vector<40x128xf32> -> vector<40x128xf32>
    %143 = vector.extract_strided_slice %29 {offsets = [2, 0], sizes = [1, 128], strides = [1, 1]} : vector<4x128xf32> to vector<1x128xf32>
    %144 = vector.broadcast %143 : vector<1x128xf32> to vector<40x128xf32>
    %145 = arith.addf %142, %144 : vector<40x128xf32>
    %cst_74 = arith.constant 5.000000e-01 : f32
    %146 = vector.broadcast %cst_74 : f32 to vector<40x128xf32>
    %147 = arith.mulf %146, %145 : vector<40x128xf32>
    %cst_75 = arith.constant 4.471500e-02 : f32
    %148 = vector.broadcast %cst_75 : f32 to vector<40x128xf32>
    %149 = arith.mulf %148, %145 : vector<40x128xf32>
    %150 = arith.mulf %149, %145 : vector<40x128xf32>
    %151 = arith.mulf %150, %145 : vector<40x128xf32>
    %152 = arith.addf %145, %151 : vector<40x128xf32>
    %cst_76 = arith.constant 0.797884583 : f32
    %153 = vector.broadcast %cst_76 : f32 to vector<40x128xf32>
    %154 = arith.mulf %153, %152 : vector<40x128xf32>
    %155 = math.tanh %154 : vector<40x128xf32>
    %cst_77 = arith.constant 1.000000e+00 : f32
    %156 = vector.broadcast %cst_77 : f32 to vector<40x128xf32>
    %157 = arith.addf %156, %155 : vector<40x128xf32>
    %158 = arith.mulf %147, %157 : vector<40x128xf32>
    %159 = arith.truncf %158 : vector<40x128xf32> to vector<40x128xbf16>
    %c2_78 = arith.constant 2 : index
    %c0_79 = arith.constant 0 : index
    %c0_80 = arith.constant 0 : index
    %160 = vector.load %arg13[%c2_78, %c0_79, %c0_80] : memref<4x128x32xbf16, #tpu.memory_space<vmem>>, vector<1x128x32xbf16>
    %161 = vector.shape_cast %160 : vector<1x128x32xbf16> to vector<128x32xbf16>
    %cst_81 = arith.constant dense<0.000000e+00> : vector<40x32xf32>
    %162 = tpu.matmul %159, %161, %cst_81 {dimension_numbers = #tpu.dot_dimension_numbers<[1], [0], [0], [1], [0, 0, 1, 1], [], []>} : vector<40x128xbf16>, vector<128x32xbf16>, vector<40x32xf32> -> vector<40x32xf32>
    %163 = vector.extract_strided_slice %30 {offsets = [2, 0], sizes = [1, 32], strides = [1, 1]} : vector<4x32xf32> to vector<1x32xf32>
    %164 = vector.broadcast %163 : vector<1x32xf32> to vector<40x32xf32>
    %165 = arith.addf %162, %164 : vector<40x32xf32>
    %cst_82 = arith.constant dense<0.000000e+00> : vector<40xf32>
    %166 = vector.multi_reduction <add>, %165, %cst_82 [1] : vector<40x32xf32> to vector<40xf32>
    %167 = vector.shape_cast %166 : vector<40xf32> to vector<40x1xf32>
    %cst_83 = arith.constant 3.200000e+01 : f32
    %168 = vector.broadcast %cst_83 : f32 to vector<40x1xf32>
    %169 = arith.divf %167, %168 : vector<40x1xf32>
    %170 = arith.mulf %165, %165 : vector<40x32xf32>
    %cst_84 = arith.constant dense<0.000000e+00> : vector<40xf32>
    %171 = vector.multi_reduction <add>, %170, %cst_84 [1] : vector<40x32xf32> to vector<40xf32>
    %172 = vector.shape_cast %171 : vector<40xf32> to vector<40x1xf32>
    %cst_85 = arith.constant 3.200000e+01 : f32
    %173 = vector.broadcast %cst_85 : f32 to vector<40x1xf32>
    %174 = arith.divf %172, %173 : vector<40x1xf32>
    %175 = vector.broadcast %169 : vector<40x1xf32> to vector<40x32xf32>
    %176 = arith.subf %165, %175 : vector<40x32xf32>
    %177 = arith.mulf %169, %169 : vector<40x1xf32>
    %178 = arith.subf %174, %177 : vector<40x1xf32>
    %cst_86 = arith.constant 9.99999974E-6 : f32
    %179 = vector.broadcast %cst_86 : f32 to vector<40x1xf32>
    %180 = arith.addf %178, %179 : vector<40x1xf32>
    %181 = math.rsqrt %180 : vector<40x1xf32>
    %182 = vector.broadcast %181 : vector<40x1xf32> to vector<40x32xf32>
    %183 = arith.mulf %176, %182 : vector<40x32xf32>
    %184 = arith.truncf %183 : vector<40x32xf32> to vector<40x32xbf16>
    %c3 = arith.constant 3 : index
    %c0_87 = arith.constant 0 : index
    %c0_88 = arith.constant 0 : index
    %185 = vector.load %arg11[%c3, %c0_87, %c0_88] : memref<4x32x128xbf16, #tpu.memory_space<vmem>>, vector<1x32x128xbf16>
    %186 = vector.shape_cast %185 : vector<1x32x128xbf16> to vector<32x128xbf16>
    %cst_89 = arith.constant dense<0.000000e+00> : vector<40x128xf32>
    %187 = tpu.matmul %184, %186, %cst_89 {dimension_numbers = #tpu.dot_dimension_numbers<[1], [0], [0], [1], [0, 0, 1, 1], [], []>} : vector<40x32xbf16>, vector<32x128xbf16>, vector<40x128xf32> -> vector<40x128xf32>
    %188 = vector.extract_strided_slice %29 {offsets = [3, 0], sizes = [1, 128], strides = [1, 1]} : vector<4x128xf32> to vector<1x128xf32>
    %189 = vector.broadcast %188 : vector<1x128xf32> to vector<40x128xf32>
    %190 = arith.addf %187, %189 : vector<40x128xf32>
    %cst_90 = arith.constant 5.000000e-01 : f32
    %191 = vector.broadcast %cst_90 : f32 to vector<40x128xf32>
    %192 = arith.mulf %191, %190 : vector<40x128xf32>
    %cst_91 = arith.constant 4.471500e-02 : f32
    %193 = vector.broadcast %cst_91 : f32 to vector<40x128xf32>
    %194 = arith.mulf %193, %190 : vector<40x128xf32>
    %195 = arith.mulf %194, %190 : vector<40x128xf32>
    %196 = arith.mulf %195, %190 : vector<40x128xf32>
    %197 = arith.addf %190, %196 : vector<40x128xf32>
    %cst_92 = arith.constant 0.797884583 : f32
    %198 = vector.broadcast %cst_92 : f32 to vector<40x128xf32>
    %199 = arith.mulf %198, %197 : vector<40x128xf32>
    %200 = math.tanh %199 : vector<40x128xf32>
    %cst_93 = arith.constant 1.000000e+00 : f32
    %201 = vector.broadcast %cst_93 : f32 to vector<40x128xf32>
    %202 = arith.addf %201, %200 : vector<40x128xf32>
    %203 = arith.mulf %192, %202 : vector<40x128xf32>
    %204 = arith.truncf %203 : vector<40x128xf32> to vector<40x128xbf16>
    %c3_94 = arith.constant 3 : index
    %c0_95 = arith.constant 0 : index
    %c0_96 = arith.constant 0 : index
    %205 = vector.load %arg13[%c3_94, %c0_95, %c0_96] : memref<4x128x32xbf16, #tpu.memory_space<vmem>>, vector<1x128x32xbf16>
    %206 = vector.shape_cast %205 : vector<1x128x32xbf16> to vector<128x32xbf16>
    %cst_97 = arith.constant dense<0.000000e+00> : vector<40x32xf32>
    %207 = tpu.matmul %204, %206, %cst_97 {dimension_numbers = #tpu.dot_dimension_numbers<[1], [0], [0], [1], [0, 0, 1, 1], [], []>} : vector<40x128xbf16>, vector<128x32xbf16>, vector<40x32xf32> -> vector<40x32xf32>
    %208 = vector.extract_strided_slice %30 {offsets = [3, 0], sizes = [1, 32], strides = [1, 1]} : vector<4x32xf32> to vector<1x32xf32>
    %209 = vector.broadcast %208 : vector<1x32xf32> to vector<40x32xf32>
    %210 = arith.addf %207, %209 : vector<40x32xf32>
    %211 = arith.truncf %210 : vector<40x32xf32> to vector<40x32xbf16>
    %c0_98 = arith.constant 0 : index
    %c0_99 = arith.constant 0 : index
    %212 = vector.load %arg15[%c0_98, %c0_99] : memref<32x128xbf16, #tpu.memory_space<vmem>>, vector<32x128xbf16>
    %cst_100 = arith.constant dense<0.000000e+00> : vector<40x128xf32>
    %213 = tpu.matmul %211, %212, %cst_100 {dimension_numbers = #tpu.dot_dimension_numbers<[1], [0], [0], [1], [0, 0, 1, 1], [], []>} : vector<40x32xbf16>, vector<32x128xbf16>, vector<40x128xf32> -> vector<40x128xf32>
    %c0_101 = arith.constant 0 : index
    %c0_102 = arith.constant 0 : index
    %214 = vector.load %arg16[%c0_101, %c0_102] : memref<1x128xf32, #tpu.memory_space<vmem>>, vector<1x128xf32>
    %215 = vector.broadcast %214 : vector<1x128xf32> to vector<40x128xf32>
    %216 = arith.addf %213, %215 : vector<40x128xf32>
    %c0_103 = arith.constant 0 : index
    %c0_104 = arith.constant 0 : index
    %217 = vector.load %arg17[%c0_103, %c0_104] : memref<40x128xf32, #tpu.memory_space<vmem>>, vector<40x128xf32>
    tpu.vector_store %arg17[%c0_103, %c0_104], %216 {strides = array<i32>} : memref<40x128xf32, #tpu.memory_space<vmem>>, vector<40x128xf32>,
    return
  }
  func.func @transform_0(%arg0: i32) -> (i32, i32) {
    %c0_i32 = arith.constant 0 : i32
    %c0_i32_0 = arith.constant 0 : i32
    %c0_i32_1 = arith.constant 0 : i32
    return %c0_i32, %c0_i32_0 : i32, i32
  }
  func.func @transform_1(%arg0: i32) -> (i32, i32) {
    %c0_i32 = arith.constant 0 : i32
    %c0_i32_0 = arith.constant 0 : i32
    %c0_i32_1 = arith.constant 0 : i32
    return %c0_i32, %c0_i32_0 : i32, i32
  }
  func.func @transform_2(%arg0: i32) -> (i32, i32) {
    %c0_i32 = arith.constant 0 : i32
    %c0_i32_0 = arith.constant 0 : i32
    %c0_i32_1 = arith.constant 0 : i32
    return %c0_i32, %c0_i32_0 : i32, i32
  }
  func.func @transform_3(%arg0: i32) -> (i32, i32) {
    %c0_i32 = arith.constant 0 : i32
    %c0_i32_0 = arith.constant 0 : i32
    %c0_i32_1 = arith.constant 0 : i32
    return %c0_i32, %c0_i32_0 : i32, i32
  }
  func.func @transform_4(%arg0: i32) -> (i32, i32) {
    %c0_i32 = arith.constant 0 : i32
    %c0_i32_0 = arith.constant 0 : i32
    %c0_i32_1 = arith.constant 0 : i32
    return %c0_i32, %c0_i32_0 : i32, i32
  }
  func.func @transform_5(%arg0: i32) -> (i32, i32) {
    %c0_i32 = arith.constant 0 : i32
    %c0_i32_0 = arith.constant 0 : i32
    %c0_i32_1 = arith.constant 0 : i32
    return %c0_i32, %c0_i32_0 : i32, i32
  }
  func.func @transform_6(%arg0: i32) -> (i32, i32) {
    %c0_i32 = arith.constant 0 : i32
    %c0_i32_0 = arith.constant 0 : i32
    %c0_i32_1 = arith.constant 0 : i32
    return %c0_i32, %c0_i32_0 : i32, i32
  }
  func.func @transform_7(%arg0: i32) -> (i32, i32) {
    %c0_i32 = arith.constant 0 : i32
    %c0_i32_0 = arith.constant 0 : i32
    %c0_i32_1 = arith.constant 0 : i32
    return %c0_i32, %c0_i32_0 : i32, i32
  }
  func.func @transform_8(%arg0: i32) -> (i32, i32) {
    %c0_i32 = arith.constant 0 : i32
    %c0_i32_0 = arith.constant 0 : i32
    %c0_i32_1 = arith.constant 0 : i32
    return %c0_i32, %c0_i32_0 : i32, i32
  }
  func.func @transform_9(%arg0: i32) -> (i32, i32) {
    %c0_i32 = arith.constant 0 : i32
    %c0_i32_0 = arith.constant 0 : i32
    %c0_i32_1 = arith.constant 0 : i32
    return %c0_i32, %c0_i32_0 : i32, i32
  }
  func.func @transform_10(%arg0: i32) -> (i32, i32, i32) {
    %c0_i32 = arith.constant 0 : i32
    %c0_i32_0 = arith.constant 0 : i32
    %c0_i32_1 = arith.constant 0 : i32
    %c0_i32_2 = arith.constant 0 : i32
    return %c0_i32, %c0_i32_0, %c0_i32_1 : i32, i32, i32
  }
  func.func @transform_11(%arg0: i32) -> (i32, i32) {
    %c0_i32 = arith.constant 0 : i32
    %c0_i32_0 = arith.constant 0 : i32
    %c0_i32_1 = arith.constant 0 : i32
    return %c0_i32, %c0_i32_0 : i32, i32
  }
  func.func @transform_12(%arg0: i32) -> (i32, i32, i32) {
    %c0_i32 = arith.constant 0 : i32
    %c0_i32_0 = arith.constant 0 : i32
    %c0_i32_1 = arith.constant 0 : i32
    %c0_i32_2 = arith.constant 0 : i32
    return %c0_i32, %c0_i32_0, %c0_i32_1 : i32, i32, i32
  }
  func.func @transform_13(%arg0: i32) -> (i32, i32) {
    %c0_i32 = arith.constant 0 : i32
    %c0_i32_0 = arith.constant 0 : i32
    %c0_i32_1 = arith.constant 0 : i32
    return %c0_i32, %c0_i32_0 : i32, i32
  }
  func.func @transform_14(%arg0: i32) -> (i32, i32) {
    %c0_i32 = arith.constant 0 : i32
    %c0_i32_0 = arith.constant 0 : i32
    %c0_i32_1 = arith.constant 0 : i32
    return %c0_i32, %c0_i32_0 : i32, i32
  }
  func.func @transform_15(%arg0: i32) -> (i32, i32) {
    %c0_i32 = arith.constant 0 : i32
    %c0_i32_0 = arith.constant 0 : i32
    %c0_i32_1 = arith.constant 0 : i32
    return %c0_i32, %c0_i32_0 : i32, i32
  }
  func.func @transform_16(%arg0: i32) -> (i32, i32) {
    %c0_i32 = arith.constant 0 : i32
    %c0_i32_0 = arith.constant 0 : i32
    %c0_i32_1 = arith.constant 0 : i32
    return %c0_i32, %c0_i32_0 : i32, i32
  }
}

</mosaic_0001>

<llo_original>
// kernel: tpu_custom_call.1
$region0: #{tpu_custom_call.1}
  #allocation0 [shape = 'u32[]', space=smem, size = 0x4, offset = 0x4, fixed_abs, tag = 'smem constant byte address 0x4 - core index']
  #allocation1 [shape = 'u32[144,128]{1,0:T(1,128)}', space=vmem, size = 0x12000, scoped, tag = 'internal scratch']
  #allocation2 [shape = 'f32[40,32]{1,0:T(8,128)}', space=vmem, size = 0x5000, scoped, tag = 'scratch operand']
  %s0 = inlined_call_operand.vmem [shape: f32[2,32], index: 0, kind: input, shape index: {}]
  %s1 = inlined_call_operand.vmem [shape: f32[2,8], index: 1, kind: input, shape index: {}]
  %s2 = inlined_call_operand.vmem [shape: f32[32,32], index: 2, kind: input, shape index: {}]
  %s3 = inlined_call_operand.vmem [shape: f32[32,32], index: 3, kind: input, shape index: {}]
  %s4 = inlined_call_operand.vmem [shape: bf16[32,32], index: 4, kind: input, shape index: {}]
  %s5 = inlined_call_operand.vmem [shape: f32[1,32], index: 5, kind: input, shape index: {}]
  %s6 = inlined_call_operand.vmem [shape: bf16[8,32], index: 6, kind: input, shape index: {}]
  %s7 = inlined_call_operand.vmem [shape: f32[1,32], index: 7, kind: input, shape index: {}]
  %s8 = inlined_call_operand.vmem [shape: bf16[32,32], index: 8, kind: input, shape index: {}]
  %s9 = inlined_call_operand.vmem [shape: f32[1,32], index: 9, kind: input, shape index: {}]
  %s10 = inlined_call_operand.vmem [shape: bf16[4,32,128], index: 10, kind: input, shape index: {}]
  %s11 = inlined_call_operand.vmem [shape: f32[4,128], index: 11, kind: input, shape index: {}]
  %s12 = inlined_call_operand.vmem [shape: bf16[4,128,32], index: 12, kind: input, shape index: {}]
  %s13 = inlined_call_operand.vmem [shape: f32[4,32], index: 13, kind: input, shape index: {}]
  %s14 = inlined_call_operand.vmem [shape: bf16[32,128], index: 14, kind: input, shape index: {}]
  %s15 = inlined_call_operand.vmem [shape: f32[1,128], index: 15, kind: input, shape index: {}]
  %s16 = inlined_call_operand.hbm [shape: f32[40,128], index: 16, kind: output, shape index: {}]
  %s17 = sld [smem:[#allocation0]]
  $region74: #{tpu_custom_call.1} parent=0
    _
  %s19 = ssub.s32 1, %s17
  %s20 = scalar_select 0, %s19, %s17
  $region1: #{tpu_custom_call.1} parent=0
    #allocation3 [shape = 'u8[20480]{0}', space=vmem, size = 0x5000, scoped, tag = 'output window, operand 0, single buffered']
    #allocation4 [shape = 's32[1]{0}', space=sflag, size = 0x4, scoped, tag = 'scoped memory for tpu_custom_call.1']
    %21 = vsyncpa [#allocation4], 0
    // Predicated region
    $region2: #{tpu_custom_call.1} parent=1 // pred_check
      _
    $region3: #{tpu_custom_call.1} parent=1 // pred_check_branch
      %23 = sbr.rel (0) target = $region5
    $region4: #{tpu_custom_call.1} parent=1 // pred_region
      _
    $region5: #{tpu_custom_call.1} parent=1 // pred_fallthru
      _
    // Predicated region
    $region6: #{tpu_custom_call.1} parent=1 // pred_check
      _
    $region7: #{tpu_custom_call.1} parent=1 // pred_check_branch
      %25 = sbr.rel (0) target = $region9
    $region8: #{tpu_custom_call.1} parent=1 // pred_region
      _
    $region9: #{tpu_custom_call.1} parent=1 // pred_fallthru
      _
    // Predicated region
    $region10: #{tpu_custom_call.1} parent=1 // pred_check
      _
    $region11: #{tpu_custom_call.1} parent=1 // pred_check_branch
      %27 = sbr.rel (0) target = $region13
    $region12: #{tpu_custom_call.1} parent=1 // pred_region
      _
    $region13: #{tpu_custom_call.1} parent=1 // pred_fallthru
      _
    // Predicated region
    $region14: #{tpu_custom_call.1} parent=1 // pred_check
      _
    $region15: #{tpu_custom_call.1} parent=1 // pred_check_branch
      %29 = sbr.rel (0) target = $region17
    $region16: #{tpu_custom_call.1} parent=1 // pred_region
      _
    $region17: #{tpu_custom_call.1} parent=1 // pred_fallthru
      _
    // Predicated region
    $region18: #{tpu_custom_call.1} parent=1 // pred_check
      _
    $region19: #{tpu_custom_call.1} parent=1 // pred_check_branch
      %31 = sbr.rel (0) target = $region21
    $region20: #{tpu_custom_call.1} parent=1 // pred_region
      _
    $region21: #{tpu_custom_call.1} parent=1 // pred_fallthru
      _
    // Predicated region
    $region22: #{tpu_custom_call.1} parent=1 // pred_check
      _
    $region23: #{tpu_custom_call.1} parent=1 // pred_check_branch
      %33 = sbr.rel (0) target = $region25
    $region24: #{tpu_custom_call.1} parent=1 // pred_region
      _
    $region25: #{tpu_custom_call.1} parent=1 // pred_fallthru
      _
    // Predicated region
    $region26: #{tpu_custom_call.1} parent=1 // pred_check
      _
    $region27: #{tpu_custom_call.1} parent=1 // pred_check_branch
      %35 = sbr.rel (0) target = $region29
    $region28: #{tpu_custom_call.1} parent=1 // pred_region
      _
    $region29: #{tpu_custom_call.1} parent=1 // pred_fallthru
      _
    // Predicated region
    $region30: #{tpu_custom_call.1} parent=1 // pred_check
      _
    $region31: #{tpu_custom_call.1} parent=1 // pred_check_branch
      %37 = sbr.rel (0) target = $region33
    $region32: #{tpu_custom_call.1} parent=1 // pred_region
      _
    $region33: #{tpu_custom_call.1} parent=1 // pred_fallthru
      _
    // Predicated region
    $region34: #{tpu_custom_call.1} parent=1 // pred_check
      _
    $region35: #{tpu_custom_call.1} parent=1 // pred_check_branch
      %39 = sbr.rel (0) target = $region37
    $region36: #{tpu_custom_call.1} parent=1 // pred_region
      _
    $region37: #{tpu_custom_call.1} parent=1 // pred_fallthru
      _
    // Predicated region
    $region38: #{tpu_custom_call.1} parent=1 // pred_check
      _
    $region39: #{tpu_custom_call.1} parent=1 // pred_check_branch
      %41 = sbr.rel (0) target = $region41
    $region40: #{tpu_custom_call.1} parent=1 // pred_region
      _
    $region41: #{tpu_custom_call.1} parent=1 // pred_fallthru
      _
    // Predicated region
    $region42: #{tpu_custom_call.1} parent=1 // pred_check
      _
    $region43: #{tpu_custom_call.1} parent=1 // pred_check_branch
      %43 = sbr.rel (0) target = $region45
    $region44: #{tpu_custom_call.1} parent=1 // pred_region
      _
    $region45: #{tpu_custom_call.1} parent=1 // pred_fallthru
      _
    // Predicated region
    $region46: #{tpu_custom_call.1} parent=1 // pred_check
      _
    $region47: #{tpu_custom_call.1} parent=1 // pred_check_branch
      %45 = sbr.rel (0) target = $region49
    $region48: #{tpu_custom_call.1} parent=1 // pred_region
      _
    $region49: #{tpu_custom_call.1} parent=1 // pred_fallthru
      _
    // Predicated region
    $region50: #{tpu_custom_call.1} parent=1 // pred_check
      _
    $region51: #{tpu_custom_call.1} parent=1 // pred_check_branch
      %47 = sbr.rel (0) target = $region53
    $region52: #{tpu_custom_call.1} parent=1 // pred_region
      _
    $region53: #{tpu_custom_call.1} parent=1 // pred_fallthru
      _
    // Predicated region
    $region54: #{tpu_custom_call.1} parent=1 // pred_check
      _
    $region55: #{tpu_custom_call.1} parent=1 // pred_check_branch
      %49 = sbr.rel (0) target = $region57
    $region56: #{tpu_custom_call.1} parent=1 // pred_region
      _
    $region57: #{tpu_custom_call.1} parent=1 // pred_fallthru
      _
    // Predicated region
    $region58: #{tpu_custom_call.1} parent=1 // pred_check
      _
    $region59: #{tpu_custom_call.1} parent=1 // pred_check_branch
      %51 = sbr.rel (0) target = $region61
    $region60: #{tpu_custom_call.1} parent=1 // pred_region
      _
    $region61: #{tpu_custom_call.1} parent=1 // pred_fallthru
      _
    // Predicated region
    $region62: #{tpu_custom_call.1} parent=1 // pred_check
      _
    $region63: #{tpu_custom_call.1} parent=1 // pred_check_branch
      %53 = sbr.rel (0) target = $region65
    $region64: #{tpu_custom_call.1} parent=1 // pred_region
      _
    $region65: #{tpu_custom_call.1} parent=1 // pred_fallthru
      _
    %v55 = vld [vmem:[%s0] sm:$0x3]
    %v56 = vpack.c.bf16 %v55, %v55
    %v57 = vld [vmem:[%s4] sm:$0xf]
    %v58 = vld [vmem:[%s4 + $0x4] sm:$0xf]
    %v59 = vld [vmem:[%s4 + $0x8] sm:$0xf]
    %v60 = vld [vmem:[%s4 + $0xc] sm:$0xf]
    %v61 = vld [vmem:[%s5] sm:$0x1]
    %v63 = vlaneseq
    %v64 = vshrl.u32 %v63, 7
    %v65 = vsub.s32 0, %v64
    %v66 = vrot.slane %v61, %v65
    %v72 = vunpack.c.l.b16 %v57
    %v73 = vunpack.c.l.b16 %v58
    %v74 = vunpack.c.l.b16 %v59
    %v75 = vunpack.c.l.b16 %v60
    %v76 = vpack.c.b16 %v73, %v72
    %v77 = vpack.c.b16 %v75, %v74
    %vm80 = vcmask 261120
    %v82 = vsel %vm80, %v56, 0
    %84 = vmatprep.subr.bf16.mxu0 0
    %85 = vmatpush1.bf16.msra.mxu0 %v76
    %86 = vmatprep.subr.bf16.mxu0 0
    %87 = vmatpush1.bf16.msra.mxu0 %v77
    %88 = vmatprep.subr.bf16.mxu0 0
    %89 = vmatpush1.bf16.msra.mxu0 0
    %90 = vmatprep.subr.bf16.mxu0 0
    %91 = vmatpush1.bf16.msra.mxu0 0
    %92 = vmatprep.subr.bf16.mxu0 0
    %93 = vmatpush1.bf16.msra.mxu0 0
    %94 = vmatprep.subr.bf16.mxu0 0
    %95 = vmatpush1.bf16.msra.mxu0 0
    %96 = vmatprep.subr.bf16.mxu0 0
    %97 = vmatpush1.bf16.msra.mxu0 0
    %98 = vmatprep.subr.bf16.mxu0 0
    %99 = vmatpush1.bf16.msra.mxu0 0
    %100 = vmatprep.subr.bf16.mxu0 0
    %101 = vmatpush1.bf16.msra.mxu0 0
    %102 = vmatprep.subr.bf16.mxu0 0
    %103 = vmatpush1.bf16.msra.mxu0 0
    %104 = vmatprep.subr.bf16.mxu0 0
    %105 = vmatpush1.bf16.msra.mxu0 0
    %106 = vmatprep.subr.bf16.mxu0 0
    %107 = vmatpush1.bf16.msra.mxu0 0
    %108 = vmatprep.subr.bf16.mxu0 0
    %109 = vmatpush1.bf16.msra.mxu0 0
    %110 = vmatprep.subr.bf16.mxu0 0
    %111 = vmatpush1.bf16.msra.mxu0 0
    %112 = vmatprep.subr.bf16.mxu0 0
    %113 = vmatpush1.bf16.msra.mxu0 0
    %114 = vmatprep.subr.bf16.mxu0 0
    %115 = vmatpush1.bf16.msra.mxu0 0
    %116 = vmatprep.mubr.bf16.mxu0 0
    %117 = vmatmul.mubr.bf16.gmra.mrb[0].mxu0 %v82
    %v118 = vpop.f32.mrb[0].mxu0
    %v119 = vadd.f32 %v66, %v118
    %v120 = vpop.f32.mrb[0].mxu0
    %v121 = vpop.f32.mrb[0].mxu0
    %v122 = vpop.f32.mrb[0].mxu0
    %123 = vdwg.mxu0
    %v124 = vld [vmem:[%s1] sm:$0x3]
    %v125 = vpack.c.bf16 %v124, %v124
    %v126 = vld [vmem:[%s6] sm:$0xf]
    %v127 = vld [vmem:[%s7] sm:$0x1]
    %v129 = vlaneseq
    %v130 = vshrl.u32 %v129, 7
    %v131 = vsub.s32 0, %v130
    %v132 = vrot.slane %v127, %v131
    %vm134 = vcmask 64512
    %v136 = vsel %vm134, %v125, 0
    %vm138 = vcmask 1043456
    %v140 = vsel %vm138, %v126, 0
    %142 = vmatprep.subr.bf16.mxu0 0
    %143 = vmatpush1.bf16.msra.mxu0 %v140
    %144 = vmatprep.subr.bf16.mxu0 0
    %145 = vmatpush1.bf16.msra.mxu0 0
    %146 = vmatprep.subr.bf16.mxu0 0
    %147 = vmatpush1.bf16.msra.mxu0 0
    %148 = vmatprep.subr.bf16.mxu0 0
    %149 = vmatpush1.bf16.msra.mxu0 0
    %150 = vmatprep.subr.bf16.mxu0 0
    %151 = vmatpush1.bf16.msra.mxu0 0
    %152 = vmatprep.subr.bf16.mxu0 0
    %153 = vmatpush1.bf16.msra.mxu0 0
    %154 = vmatprep.subr.bf16.mxu0 0
    %155 = vmatpush1.bf16.msra.mxu0 0
    %156 = vmatprep.subr.bf16.mxu0 0
    %157 = vmatpush1.bf16.msra.mxu0 0
    %158 = vmatprep.subr.bf16.mxu0 0
    %159 = vmatpush1.bf16.msra.mxu0 0
    %160 = vmatprep.subr.bf16.mxu0 0
    %161 = vmatpush1.bf16.msra.mxu0 0
    %162 = vmatprep.subr.bf16.mxu0 0
    %163 = vmatpush1.bf16.msra.mxu0 0
    %164 = vmatprep.subr.bf16.mxu0 0
    %165 = vmatpush1.bf16.msra.mxu0 0
    %166 = vmatprep.subr.bf16.mxu0 0
    %167 = vmatpush1.bf16.msra.mxu0 0
    %168 = vmatprep.subr.bf16.mxu0 0
    %169 = vmatpush1.bf16.msra.mxu0 0
    %170 = vmatprep.subr.bf16.mxu0 0
    %171 = vmatpush1.bf16.msra.mxu0 0
    %172 = vmatprep.subr.bf16.mxu0 0
    %173 = vmatpush1.bf16.msra.mxu0 0
    %174 = vmatprep.mubr.bf16.mxu0 0
    %175 = vmatmul.mubr.bf16.gmra.mrb[0].mxu0 %v136
    %v176 = vpop.f32.mrb[0].mxu0
    %v177 = vadd.f32 %v132, %v176
    %v178 = vpop.f32.mrb[0].mxu0
    %v179 = vpop.f32.mrb[0].mxu0
    %v180 = vpop.f32.mrb[0].mxu0
    %181 = vdwg.mxu0
    %v182 = vld [vmem:[%s2] sm:$0xff]
    %v183 = vld [vmem:[%s2 + $0x8] sm:$0xff]
    %v184 = vld [vmem:[%s2 + $0x10] sm:$0xff]
    %v185 = vld [vmem:[%s2 + $0x18] sm:$0xff]
    %v186 = vld [vmem:[%s3] sm:$0xff]
    %v187 = vld [vmem:[%s3 + $0x8] sm:$0xff]
    %v188 = vld [vmem:[%s3 + $0x10] sm:$0xff]
    %v189 = vld [vmem:[%s3 + $0x18] sm:$0xff]
    %v190 = vmul.f32 %v182, %v186
    %v191 = vmul.f32 %v183, %v187
    %v192 = vmul.f32 %v184, %v188
    %v193 = vmul.f32 %v185, %v189
    %v194 = vpack.c.bf16 %v191, %v190
    %v195 = vpack.c.bf16 %v193, %v192
    %v196 = vld [vmem:[%s8] sm:$0xf]
    %v197 = vld [vmem:[%s8 + $0x4] sm:$0xf]
    %v198 = vld [vmem:[%s8 + $0x8] sm:$0xf]
    %v199 = vld [vmem:[%s8 + $0xc] sm:$0xf]
    %v200 = vld [vmem:[%s9] sm:$0x1]
    %v202 = vlaneseq
    %v203 = vshrl.u32 %v202, 7
    %v204 = vsub.s32 0, %v203
    %v205 = vrot.slane %v200, %v204
    %v211 = vunpack.c.l.b16 %v196
    %v212 = vunpack.c.l.b16 %v197
    %v213 = vunpack.c.l.b16 %v198
    %v214 = vunpack.c.l.b16 %v199
    %v215 = vpack.c.b16 %v212, %v211
    %v216 = vpack.c.b16 %v214, %v213
    %v220 = vsel %vm80, %v194, 0
    %v223 = vsel %vm80, %v195, 0
    %225 = vmatprep.subr.bf16.mxu0 0
    %226 = vmatpush1.bf16.msra.mxu0 %v215
    %227 = vmatprep.subr.bf16.mxu0 0
    %228 = vmatpush1.bf16.msra.mxu0 %v216
    %229 = vmatprep.subr.bf16.mxu0 0
    %230 = vmatpush1.bf16.msra.mxu0 0
    %231 = vmatprep.subr.bf16.mxu0 0
    %232 = vmatpush1.bf16.msra.mxu0 0
    %233 = vmatprep.subr.bf16.mxu0 0
    %234 = vmatpush1.bf16.msra.mxu0 0
    %235 = vmatprep.subr.bf16.mxu0 0
    %236 = vmatpush1.bf16.msra.mxu0 0
    %237 = vmatprep.subr.bf16.mxu0 0
    %238 = vmatpush1.bf16.msra.mxu0 0
    %239 = vmatprep.subr.bf16.mxu0 0
    %240 = vmatpush1.bf16.msra.mxu0 0
    %241 = vmatprep.subr.bf16.mxu0 0
    %242 = vmatpush1.bf16.msra.mxu0 0
    %243 = vmatprep.subr.bf16.mxu0 0
    %244 = vmatpush1.bf16.msra.mxu0 0
    %245 = vmatprep.subr.bf16.mxu0 0
    %246 = vmatpush1.bf16.msra.mxu0 0
    %247 = vmatprep.subr.bf16.mxu0 0
    %248 = vmatpush1.bf16.msra.mxu0 0
    %249 = vmatprep.subr.bf16.mxu0 0
    %250 = vmatpush1.bf16.msra.mxu0 0
    %251 = vmatprep.subr.bf16.mxu0 0
    %252 = vmatpush1.bf16.msra.mxu0 0
    %253 = vmatprep.subr.bf16.mxu0 0
    %254 = vmatpush1.bf16.msra.mxu0 0
    %255 = vmatprep.subr.bf16.mxu0 0
    %256 = vmatpush1.bf16.msra.mxu0 0
    %257 = vmatprep.mubr.bf16.mxu0 0
    %258 = vmatmul.mubr.bf16.gmra.mrb[0].mxu0 %v220
    %v259 = vpop.f32.mrb[0].mxu0
    %v260 = vadd.f32 %v205, %v259
    %v261 = vpop.f32.mrb[0].mxu0
    %v262 = vpop.f32.mrb[0].mxu0
    %v263 = vadd.f32 %v205, %v262
    %v264 = vpop.f32.mrb[0].mxu0
    %265 = vmatprep.mubr.bf16.mxu0 0
    %266 = vmatmul.mubr.bf16.gmra.mrb[0].mxu0 %v223
    %v267 = vpop.f32.mrb[0].mxu0
    %v268 = vadd.f32 %v205, %v267
    %v269 = vpop.f32.mrb[0].mxu0
    %v270 = vpop.f32.mrb[0].mxu0
    %v271 = vadd.f32 %v205, %v270
    %v272 = vpop.f32.mrb[0].mxu0
    %273 = vdwg.mxu0
    %274 = vst.msk [vmem:[#allocation2] sm:$0xff] %vm80, %v260
    %275 = vst.msk [vmem:[#allocation2 + $0x8] sm:$0xff] %vm80, %v263
    %276 = vst.msk [vmem:[#allocation2 + $0x10] sm:$0xff] %vm80, %v268
    %277 = vst.msk [vmem:[#allocation2 + $0x18] sm:$0xff] %vm80, %v271
    %vm278 = vcmask 254976
    %279 = vst.msk [vmem:[#allocation2 + $0x20] sm:$0x3] %vm278, %v119
    %280 = vst.msk [vmem:[#allocation2 + $0x22] sm:$0x3] %vm278, %v177
    %vm281 = vcmask 257024
    %282 = vst.msk [vmem:[#allocation2 + $0x24] sm:$0xf] %vm281, 0.0
    %v283 = vld [vmem:[#allocation2] sm:$0xff]
    %v284 = vld [vmem:[#allocation2 + $0x8] sm:$0xff]
    %v285 = vld [vmem:[#allocation2 + $0x10] sm:$0xff]
    %v286 = vld [vmem:[#allocation2 + $0x18] sm:$0xff]
    %v287 = vld [vmem:[#allocation2 + $0x20] sm:$0xff]
    %v288 = vld [vmem:[%s11] sm:$0xf]
    %v289 = vld [vmem:[%s13] sm:$0xf]
    %v290 = vsel %vm80, %v283, 0.0
    %291 = vadd.xlane.f32.xlu0 %v290
    %v292 = vpop.xlane.xlu0 %291
    %v293 = vsel %vm80, %v284, 0.0
    %294 = vadd.xlane.f32.xlu0 %v293
    %v295 = vpop.xlane.xlu0 %294
    %v296 = vsel %vm80, %v285, 0.0
    %297 = vadd.xlane.f32.xlu0 %v296
    %v298 = vpop.xlane.xlu0 %297
    %v299 = vsel %vm80, %v286, 0.0
    %300 = vadd.xlane.f32.xlu0 %v299
    %v301 = vpop.xlane.xlu0 %300
    %v302 = vsel %vm80, %v287, 0.0
    %303 = vadd.xlane.f32.xlu0 %v302
    %v304 = vpop.xlane.xlu0 %303
    %v305 = vrcp.pop 32.0
    %v306 = vmul.f32 %v292, %v305
    %v307 = vmul.f32 %v295, %v305
    %v308 = vmul.f32 %v298, %v305
    %v309 = vmul.f32 %v301, %v305
    %v310 = vmul.f32 %v304, %v305
    %v311 = vmul.f32 %v283, %v283
    %v312 = vmul.f32 %v284, %v284
    %v313 = vmul.f32 %v285, %v285
    %v314 = vmul.f32 %v286, %v286
    %v315 = vmul.f32 %v287, %v287
    %v316 = vsel %vm80, %v311, 0.0
    %317 = vadd.xlane.f32.xlu0 %v316
    %v318 = vpop.xlane.xlu0 %317
    %v319 = vsel %vm80, %v312, 0.0
    %320 = vadd.xlane.f32.xlu0 %v319
    %v321 = vpop.xlane.xlu0 %320
    %v322 = vsel %vm80, %v313, 0.0
    %323 = vadd.xlane.f32.xlu0 %v322
    %v324 = vpop.xlane.xlu0 %323
    %v325 = vsel %vm80, %v314, 0.0
    %326 = vadd.xlane.f32.xlu0 %v325
    %v327 = vpop.xlane.xlu0 %326
    %v328 = vsel %vm80, %v315, 0.0
    %329 = vadd.xlane.f32.xlu0 %v328
    %v330 = vpop.xlane.xlu0 %329
    %v331 = vmul.f32 %v318, %v305
    %v332 = vmul.f32 %v321, %v305
    %v333 = vmul.f32 %v324, %v305
    %v334 = vmul.f32 %v327, %v305
    %v335 = vmul.f32 %v330, %v305
    %v336 = vsub.f32 %v283, %v306
    %v337 = vsub.f32 %v284, %v307
    %v338 = vsub.f32 %v285, %v308
    %v339 = vsub.f32 %v286, %v309
    %v340 = vsub.f32 %v287, %v310
    %v341 = vmul.f32 %v306, %v306
    %v342 = vmul.f32 %v307, %v307
    %v343 = vmul.f32 %v308, %v308
    %v344 = vmul.f32 %v309, %v309
    %v345 = vmul.f32 %v310, %v310
    %v346 = vsub.f32 %v331, %v341
    %v347 = vsub.f32 %v332, %v342
    %v348 = vsub.f32 %v333, %v343
    %v349 = vsub.f32 %v334, %v344
    %v350 = vsub.f32 %v335, %v345
    %v351 = vadd.f32 %v346, 1e-05
    %v352 = vadd.f32 %v347, 1e-05
    %v353 = vadd.f32 %v348, 1e-05
    %v354 = vadd.f32 %v349, 1e-05
    %v355 = vadd.f32 %v350, 1e-05
    %v356 = vrsqrt.pop %v351
    %v357 = vrsqrt.pop %v352
    %v358 = vrsqrt.pop %v353
    %v359 = vrsqrt.pop %v354
    %v360 = vrsqrt.pop %v355
    %v361 = vmul.f32 %v336, %v356
    %v362 = vmul.f32 %v337, %v357
    %v363 = vmul.f32 %v338, %v358
    %v364 = vmul.f32 %v339, %v359
    %v365 = vmul.f32 %v340, %v360
    %v366 = vpack.c.bf16 %v362, %v361
    %v367 = vpack.c.bf16 %v364, %v363
    %v368 = vpack.c.bf16 %v365, %v365
    %v369 = vld [vmem:[%s10] sm:$0xf]
    %v370 = vld [vmem:[%s10 + $0x4] sm:$0xf]
    %v371 = vld [vmem:[%s10 + $0x8] sm:$0xf]
    %v372 = vld [vmem:[%s10 + $0xc] sm:$0xf]
    %v373 = vlaneseq
    %v374 = vshrl.u32 %v373, 7
    %v375 = vsub.s32 0, %v374
    %v376 = vrot.slane %v288, %v375
    %v381 = vunpack.c.l.b16 %v369
    %v382 = vunpack.c.l.b16 %v370
    %v383 = vunpack.c.l.b16 %v371
    %v384 = vunpack.c.l.b16 %v372
    %v385 = vpack.c.b16 %v382, %v381
    %v386 = vpack.c.b16 %v384, %v383
    %v390 = vsel %vm80, %v366, 0
    %v393 = vsel %vm80, %v367, 0
    %v396 = vsel %vm80, %v368, 0
    %398 = vmatprep.subr.bf16.mxu0 0
    %399 = vmatpush1.bf16.msra.mxu0 %v385
    %400 = vmatprep.subr.bf16.mxu0 0
    %401 = vmatpush1.bf16.msra.mxu0 %v386
    %402 = vmatprep.subr.bf16.mxu0 0
    %403 = vmatpush1.bf16.msra.mxu0 0
    %404 = vmatprep.subr.bf16.mxu0 0
    %405 = vmatpush1.bf16.msra.mxu0 0
    %406 = vmatprep.subr.bf16.mxu0 0
    %407 = vmatpush1.bf16.msra.mxu0 0
    %408 = vmatprep.subr.bf16.mxu0 0
    %409 = vmatpush1.bf16.msra.mxu0 0
    %410 = vmatprep.subr.bf16.mxu0 0
    %411 = vmatpush1.bf16.msra.mxu0 0
    %412 = vmatprep.subr.bf16.mxu0 0
    %413 = vmatpush1.bf16.msra.mxu0 0
    %414 = vmatprep.subr.bf16.mxu0 0
    %415 = vmatpush1.bf16.msra.mxu0 0
    %416 = vmatprep.subr.bf16.mxu0 0
    %417 = vmatpush1.bf16.msra.mxu0 0
    %418 = vmatprep.subr.bf16.mxu0 0
    %419 = vmatpush1.bf16.msra.mxu0 0
    %420 = vmatprep.subr.bf16.mxu0 0
    %421 = vmatpush1.bf16.msra.mxu0 0
    %422 = vmatprep.subr.bf16.mxu0 0
    %423 = vmatpush1.bf16.msra.mxu0 0
    %424 = vmatprep.subr.bf16.mxu0 0
    %425 = vmatpush1.bf16.msra.mxu0 0
    %426 = vmatprep.subr.bf16.mxu0 0
    %427 = vmatpush1.bf16.msra.mxu0 0
    %428 = vmatprep.subr.bf16.mxu0 0
    %429 = vmatpush1.bf16.msra.mxu0 0
    %430 = vmatprep.mubr.bf16.mxu0 0
    %431 = vmatmul.mubr.bf16.gmra.mrb[0].mxu0 %v390
    %v432 = vpop.f32.mrb[0].mxu0
    %v433 = vadd.f32 %v376, %v432
    %v434 = vpop.f32.mrb[0].mxu0
    %v435 = vpop.f32.mrb[0].mxu0
    %v436 = vadd.f32 %v376, %v435
    %v437 = vpop.f32.mrb[0].mxu0
    %438 = vmatprep.mubr.bf16.mxu0 0
    %439 = vmatmul.mubr.bf16.gmra.mrb[0].mxu0 %v393
    %v440 = vpop.f32.mrb[0].mxu0
    %v441 = vadd.f32 %v376, %v440
    %v442 = vpop.f32.mrb[0].mxu0
    %v443 = vpop.f32.mrb[0].mxu0
    %v444 = vadd.f32 %v376, %v443
    %v445 = vpop.f32.mrb[0].mxu0
    %446 = vmatprep.mubr.bf16.mxu0 0
    %447 = vmatmul.mubr.bf16.gmra.mrb[0].mxu0 %v396
    %v448 = vpop.f32.mrb[0].mxu0
    %v449 = vadd.f32 %v376, %v448
    %v450 = vpop.f32.mrb[0].mxu0
    %v451 = vpop.f32.mrb[0].mxu0
    %v452 = vpop.f32.mrb[0].mxu0
    %453 = vdwg.mxu0
    %v454 = vmul.f32 %v433, 0.5
    %v455 = vmul.f32 %v436, 0.5
    %v456 = vmul.f32 %v441, 0.5
    %v457 = vmul.f32 %v444, 0.5
    %v458 = vmul.f32 %v449, 0.5
    %v459 = vmul.f32 %v433, 0.044715
    %v460 = vmul.f32 %v436, 0.044715
    %v461 = vmul.f32 %v441, 0.044715
    %v462 = vmul.f32 %v444, 0.044715
    %v463 = vmul.f32 %v449, 0.044715
    %v464 = vmul.f32 %v459, %v433
    %v465 = vmul.f32 %v460, %v436
    %v466 = vmul.f32 %v461, %v441
    %v467 = vmul.f32 %v462, %v444
    %v468 = vmul.f32 %v463, %v449
    %v469 = vmul.f32 %v464, %v433
    %v470 = vmul.f32 %v465, %v436
    %v471 = vmul.f32 %v466, %v441
    %v472 = vmul.f32 %v467, %v444
    %v473 = vmul.f32 %v468, %v449
    %v474 = vadd.f32 %v433, %v469
    %v475 = vadd.f32 %v436, %v470
    %v476 = vadd.f32 %v441, %v471
    %v477 = vadd.f32 %v444, %v472
    %v478 = vadd.f32 %v449, %v473
    %v479 = vmul.f32 %v474, 0.7978846
    %v480 = vmul.f32 %v475, 0.7978846
    %v481 = vmul.f32 %v476, 0.7978846
    %v482 = vmul.f32 %v477, 0.7978846
    %v483 = vmul.f32 %v478, 0.7978846
    %v484 = vtanh.pop %v479
    %v485 = vtanh.pop %v480
    %v486 = vtanh.pop %v481
    %v487 = vtanh.pop %v482
    %v488 = vtanh.pop %v483
    %v489 = vadd.f32 %v484, 1.0
    %v490 = vadd.f32 %v485, 1.0
    %v491 = vadd.f32 %v486, 1.0
    %v492 = vadd.f32 %v487, 1.0
    %v493 = vadd.f32 %v488, 1.0
    %v494 = vmul.f32 %v454, %v489
    %v495 = vmul.f32 %v455, %v490
    %v496 = vmul.f32 %v456, %v491
    %v497 = vmul.f32 %v457, %v492
    %v498 = vmul.f32 %v458, %v493
    %v499 = vpack.c.bf16 %v495, %v494
    %v500 = vpack.c.bf16 %v497, %v496
    %v501 = vpack.c.bf16 %v498, %v498
    %v502 = vld [vmem:[%s12] sm:$0xf]
    %v503 = vld [vmem:[%s12 + $0x4] sm:$0xf]
    %v504 = vld [vmem:[%s12 + $0x8] sm:$0xf]
    %v505 = vld [vmem:[%s12 + $0xc] sm:$0xf]
    %v506 = vld [vmem:[%s12 + $0x10] sm:$0xf]
    %v507 = vld [vmem:[%s12 + $0x14] sm:$0xf]
    %v508 = vld [vmem:[%s12 + $0x18] sm:$0xf]
    %v509 = vld [vmem:[%s12 + $0x1c] sm:$0xf]
    %v510 = vld [vmem:[%s12 + $0x20] sm:$0xf]
    %v511 = vld [vmem:[%s12 + $0x24] sm:$0xf]
    %v512 = vld [vmem:[%s12 + $0x28] sm:$0xf]
    %v513 = vld [vmem:[%s12 + $0x2c] sm:$0xf]
    %v514 = vld [vmem:[%s12 + $0x30] sm:$0xf]
    %v515 = vld [vmem:[%s12 + $0x34] sm:$0xf]
    %v516 = vld [vmem:[%s12 + $0x38] sm:$0xf]
    %v517 = vld [vmem:[%s12 + $0x3c] sm:$0xf]
    %v518 = vlaneseq
    %v519 = vshrl.u32 %v518, 7
    %v520 = vsub.s32 0, %v519
    %v521 = vrot.slane %v289, %v520
    %v538 = vunpack.c.l.b16 %v502
    %v539 = vunpack.c.l.b16 %v503
    %v540 = vunpack.c.l.b16 %v504
    %v541 = vunpack.c.l.b16 %v505
    %v542 = vunpack.c.l.b16 %v506
    %v543 = vunpack.c.l.b16 %v507
    %v544 = vunpack.c.l.b16 %v508
    %v545 = vunpack.c.l.b16 %v509
    %v546 = vunpack.c.l.b16 %v510
    %v547 = vunpack.c.l.b16 %v511
    %v548 = vunpack.c.l.b16 %v512
    %v549 = vunpack.c.l.b16 %v513
    %v550 = vunpack.c.l.b16 %v514
    %v551 = vunpack.c.l.b16 %v515
    %v552 = vunpack.c.l.b16 %v516
    %v553 = vunpack.c.l.b16 %v517
    %v554 = vpack.c.b16 %v539, %v538
    %v555 = vpack.c.b16 %v541, %v540
    %v556 = vpack.c.b16 %v543, %v542
    %v557 = vpack.c.b16 %v545, %v544
    %v558 = vpack.c.b16 %v547, %v546
    %v559 = vpack.c.b16 %v549, %v548
    %v560 = vpack.c.b16 %v551, %v550
    %v561 = vpack.c.b16 %v553, %v552
    %570 = vmatprep.subr.bf16.mxu0 0
    %571 = vmatpush1.bf16.msra.mxu0 %v554
    %572 = vmatprep.subr.bf16.mxu0 0
    %573 = vmatpush1.bf16.msra.mxu0 %v555
    %574 = vmatprep.subr.bf16.mxu0 0
    %575 = vmatpush1.bf16.msra.mxu0 %v556
    %576 = vmatprep.subr.bf16.mxu0 0
    %577 = vmatpush1.bf16.msra.mxu0 %v557
    %578 = vmatprep.subr.bf16.mxu0 0
    %579 = vmatpush1.bf16.msra.mxu0 %v558
    %580 = vmatprep.subr.bf16.mxu0 0
    %581 = vmatpush1.bf16.msra.mxu0 %v559
    %582 = vmatprep.subr.bf16.mxu0 0
    %583 = vmatpush1.bf16.msra.mxu0 %v560
    %584 = vmatprep.subr.bf16.mxu0 0
    %585 = vmatpush1.bf16.msra.mxu0 %v561
    %586 = vmatprep.subr.bf16.mxu0 0
    %587 = vmatpush1.bf16.msra.mxu0 0
    %588 = vmatprep.subr.bf16.mxu0 0
    %589 = vmatpush1.bf16.msra.mxu0 0
    %590 = vmatprep.subr.bf16.mxu0 0
    %591 = vmatpush1.bf16.msra.mxu0 0
    %592 = vmatprep.subr.bf16.mxu0 0
    %593 = vmatpush1.bf16.msra.mxu0 0
    %594 = vmatprep.subr.bf16.mxu0 0
    %595 = vmatpush1.bf16.msra.mxu0 0
    %596 = vmatprep.subr.bf16.mxu0 0
    %597 = vmatpush1.bf16.msra.mxu0 0
    %598 = vmatprep.subr.bf16.mxu0 0
    %599 = vmatpush1.bf16.msra.mxu0 0
    %600 = vmatprep.subr.bf16.mxu0 0
    %601 = vmatpush1.bf16.msra.mxu0 0
    %602 = vmatprep.mubr.bf16.mxu0 0
    %603 = vmatmul.mubr.bf16.gmra.mrb[0].mxu0 %v499
    %v604 = vpop.f32.mrb[0].mxu0
    %v605 = vadd.f32 %v521, %v604
    %v606 = vpop.f32.mrb[0].mxu0
    %v607 = vpop.f32.mrb[0].mxu0
    %v608 = vadd.f32 %v521, %v607
    %v609 = vpop.f32.mrb[0].mxu0
    %610 = vmatprep.mubr.bf16.mxu0 0
    %611 = vmatmul.mubr.bf16.gmra.mrb[0].mxu0 %v500
    %v612 = vpop.f32.mrb[0].mxu0
    %v613 = vadd.f32 %v521, %v612
    %v614 = vpop.f32.mrb[0].mxu0
    %v615 = vpop.f32.mrb[0].mxu0
    %v616 = vadd.f32 %v521, %v615
    %v617 = vpop.f32.mrb[0].mxu0
    %618 = vmatprep.mubr.bf16.mxu0 0
    %619 = vmatmul.mubr.bf16.gmra.mrb[0].mxu0 %v501
    %v620 = vpop.f32.mrb[0].mxu0
    %v621 = vadd.f32 %v521, %v620
    %v622 = vpop.f32.mrb[0].mxu0
    %v623 = vpop.f32.mrb[0].mxu0
    %v624 = vpop.f32.mrb[0].mxu0
    %625 = vdwg.mxu0
    %v626 = vsel %vm80, %v605, 0.0
    %627 = vadd.xlane.f32.xlu0 %v626
    %v628 = vpop.xlane.xlu0 %627
    %v629 = vsel %vm80, %v608, 0.0
    %630 = vadd.xlane.f32.xlu0 %v629
    %v631 = vpop.xlane.xlu0 %630
    %v632 = vsel %vm80, %v613, 0.0
    %633 = vadd.xlane.f32.xlu0 %v632
    %v634 = vpop.xlane.xlu0 %633
    %v635 = vsel %vm80, %v616, 0.0
    %636 = vadd.xlane.f32.xlu0 %v635
    %v637 = vpop.xlane.xlu0 %636
    %v638 = vsel %vm80, %v621, 0.0
    %639 = vadd.xlane.f32.xlu0 %v638
    %v640 = vpop.xlane.xlu0 %639
    %v641 = vmul.f32 %v628, %v305
    %v642 = vmul.f32 %v631, %v305
    %v643 = vmul.f32 %v634, %v305
    %v644 = vmul.f32 %v637, %v305
    %v645 = vmul.f32 %v640, %v305
    %v646 = vmul.f32 %v605, %v605
    %v647 = vmul.f32 %v608, %v608
    %v648 = vmul.f32 %v613, %v613
    %v649 = vmul.f32 %v616, %v616
    %v650 = vmul.f32 %v621, %v621
    %v651 = vsel %vm80, %v646, 0.0
    %652 = vadd.xlane.f32.xlu0 %v651
    %v653 = vpop.xlane.xlu0 %652
    %v654 = vsel %vm80, %v647, 0.0
    %655 = vadd.xlane.f32.xlu0 %v654
    %v656 = vpop.xlane.xlu0 %655
    %v657 = vsel %vm80, %v648, 0.0
    %658 = vadd.xlane.f32.xlu0 %v657
    %v659 = vpop.xlane.xlu0 %658
    %v660 = vsel %vm80, %v649, 0.0
    %661 = vadd.xlane.f32.xlu0 %v660
    %v662 = vpop.xlane.xlu0 %661
    %v663 = vsel %vm80, %v650, 0.0
    %664 = vadd.xlane.f32.xlu0 %v663
    %v665 = vpop.xlane.xlu0 %664
    %v666 = vmul.f32 %v653, %v305
    %v667 = vmul.f32 %v656, %v305
    %v668 = vmul.f32 %v659, %v305
    %v669 = vmul.f32 %v662, %v305
    %v670 = vmul.f32 %v665, %v305
    %v671 = vsub.f32 %v605, %v641
    %v672 = vsub.f32 %v608, %v642
    %v673 = vsub.f32 %v613, %v643
    %v674 = vsub.f32 %v616, %v644
    %v675 = vsub.f32 %v621, %v645
    %v676 = vmul.f32 %v641, %v641
    %v677 = vmul.f32 %v642, %v642
    %v678 = vmul.f32 %v643, %v643
    %v679 = vmul.f32 %v644, %v644
    %v680 = vmul.f32 %v645, %v645
    %v681 = vsub.f32 %v666, %v676
    %v682 = vsub.f32 %v667, %v677
    %v683 = vsub.f32 %v668, %v678
    %v684 = vsub.f32 %v669, %v679
    %v685 = vsub.f32 %v670, %v680
    %v686 = vadd.f32 %v681, 1e-05
    %v687 = vadd.f32 %v682, 1e-05
    %v688 = vadd.f32 %v683, 1e-05
    %v689 = vadd.f32 %v684, 1e-05
    %v690 = vadd.f32 %v685, 1e-05
    %v691 = vrsqrt.pop %v686
    %v692 = vrsqrt.pop %v687
    %v693 = vrsqrt.pop %v688
    %v694 = vrsqrt.pop %v689
    %v695 = vrsqrt.pop %v690
    %v696 = vmul.f32 %v671, %v691
    %v697 = vmul.f32 %v672, %v692
    %v698 = vmul.f32 %v673, %v693
    %v699 = vmul.f32 %v674, %v694
    %v700 = vmul.f32 %v675, %v695
    %v701 = vpack.c.bf16 %v697, %v696
    %v702 = vpack.c.bf16 %v699, %v698
    %v703 = vpack.c.bf16 %v700, %v700
    %s704 = scalar_lea.vmem %s10, 16
    %v705 = vld [vmem:[%s704] sm:$0xf]
    %v706 = vld [vmem:[%s704 + $0x4] sm:$0xf]
    %v707 = vld [vmem:[%s704 + $0x8] sm:$0xf]
    %v708 = vld [vmem:[%s704 + $0xc] sm:$0xf]
    %v709 = vlaneseq
    %v710 = vshrl.u32 %v709, 7
    %v711 = vsub.s32 1, %v710
    %v712 = vrot.slane %v288, %v711
    %v717 = vunpack.c.l.b16 %v705
    %v718 = vunpack.c.l.b16 %v706
    %v719 = vunpack.c.l.b16 %v707
    %v720 = vunpack.c.l.b16 %v708
    %v721 = vpack.c.b16 %v718, %v717
    %v722 = vpack.c.b16 %v720, %v719
    %v726 = vsel %vm80, %v701, 0
    %v729 = vsel %vm80, %v702, 0
    %v732 = vsel %vm80, %v703, 0
    %734 = vmatprep.subr.bf16.mxu0 0
    %735 = vmatpush1.bf16.msra.mxu0 %v721
    %736 = vmatprep.subr.bf16.mxu0 0
    %737 = vmatpush1.bf16.msra.mxu0 %v722
    %738 = vmatprep.subr.bf16.mxu0 0
    %739 = vmatpush1.bf16.msra.mxu0 0
    %740 = vmatprep.subr.bf16.mxu0 0
    %741 = vmatpush1.bf16.msra.mxu0 0
    %742 = vmatprep.subr.bf16.mxu0 0
    %743 = vmatpush1.bf16.msra.mxu0 0
    %744 = vmatprep.subr.bf16.mxu0 0
    %745 = vmatpush1.bf16.msra.mxu0 0
    %746 = vmatprep.subr.bf16.mxu0 0
    %747 = vmatpush1.bf16.msra.mxu0 0
    %748 = vmatprep.subr.bf16.mxu0 0
    %749 = vmatpush1.bf16.msra.mxu0 0
    %750 = vmatprep.subr.bf16.mxu0 0
    %751 = vmatpush1.bf16.msra.mxu0 0
    %752 = vmatprep.subr.bf16.mxu0 0
    %753 = vmatpush1.bf16.msra.mxu0 0
    %754 = vmatprep.subr.bf16.mxu0 0
    %755 = vmatpush1.bf16.msra.mxu0 0
    %756 = vmatprep.subr.bf16.mxu0 0
    %757 = vmatpush1.bf16.msra.mxu0 0
    %758 = vmatprep.subr.bf16.mxu0 0
    %759 = vmatpush1.bf16.msra.mxu0 0
    %760 = vmatprep.subr.bf16.mxu0 0
    %761 = vmatpush1.bf16.msra.mxu0 0
    %762 = vmatprep.subr.bf16.mxu0 0
    %763 = vmatpush1.bf16.msra.mxu0 0
    %764 = vmatprep.subr.bf16.mxu0 0
    %765 = vmatpush1.bf16.msra.mxu0 0
    %766 = vmatprep.mubr.bf16.mxu0 0
    %767 = vmatmul.mubr.bf16.gmra.mrb[0].mxu0 %v726
    %v768 = vpop.f32.mrb[0].mxu0
    %v769 = vadd.f32 %v712, %v768
    %v770 = vpop.f32.mrb[0].mxu0
    %v771 = vpop.f32.mrb[0].mxu0
    %v772 = vadd.f32 %v712, %v771
    %v773 = vpop.f32.mrb[0].mxu0
    %774 = vmatprep.mubr.bf16.mxu0 0
    %775 = vmatmul.mubr.bf16.gmra.mrb[0].mxu0 %v729
    %v776 = vpop.f32.mrb[0].mxu0
    %v777 = vadd.f32 %v712, %v776
    %v778 = vpop.f32.mrb[0].mxu0
    %v779 = vpop.f32.mrb[0].mxu0
    %v780 = vadd.f32 %v712, %v779
    %v781 = vpop.f32.mrb[0].mxu0
    %782 = vmatprep.mubr.bf16.mxu0 0
    %783 = vmatmul.mubr.bf16.gmra.mrb[0].mxu0 %v732
    %v784 = vpop.f32.mrb[0].mxu0
    %v785 = vadd.f32 %v712, %v784
    %v786 = vpop.f32.mrb[0].mxu0
    %v787 = vpop.f32.mrb[0].mxu0
    %v788 = vpop.f32.mrb[0].mxu0
    %789 = vdwg.mxu0
    %v790 = vmul.f32 %v769, 0.5
    %v791 = vmul.f32 %v772, 0.5
    %v792 = vmul.f32 %v777, 0.5
    %v793 = vmul.f32 %v780, 0.5
    %v794 = vmul.f32 %v785, 0.5
    %v795 = vmul.f32 %v769, 0.044715
    %v796 = vmul.f32 %v772, 0.044715
    %v797 = vmul.f32 %v777, 0.044715
    %v798 = vmul.f32 %v780, 0.044715
    %v799 = vmul.f32 %v785, 0.044715
    %v800 = vmul.f32 %v795, %v769
    %v801 = vmul.f32 %v796, %v772
    %v802 = vmul.f32 %v797, %v777
    %v803 = vmul.f32 %v798, %v780
    %v804 = vmul.f32 %v799, %v785
    %v805 = vmul.f32 %v800, %v769
    %v806 = vmul.f32 %v801, %v772
    %v807 = vmul.f32 %v802, %v777
    %v808 = vmul.f32 %v803, %v780
    %v809 = vmul.f32 %v804, %v785
    %v810 = vadd.f32 %v769, %v805
    %v811 = vadd.f32 %v772, %v806
    %v812 = vadd.f32 %v777, %v807
    %v813 = vadd.f32 %v780, %v808
    %v814 = vadd.f32 %v785, %v809
    %v815 = vmul.f32 %v810, 0.7978846
    %v816 = vmul.f32 %v811, 0.7978846
    %v817 = vmul.f32 %v812, 0.7978846
    %v818 = vmul.f32 %v813, 0.7978846
    %v819 = vmul.f32 %v814, 0.7978846
    %v820 = vtanh.pop %v815
    %v821 = vtanh.pop %v816
    %v822 = vtanh.pop %v817
    %v823 = vtanh.pop %v818
    %v824 = vtanh.pop %v819
    %v825 = vadd.f32 %v820, 1.0
    %v826 = vadd.f32 %v821, 1.0
    %v827 = vadd.f32 %v822, 1.0
    %v828 = vadd.f32 %v823, 1.0
    %v829 = vadd.f32 %v824, 1.0
    %v830 = vmul.f32 %v790, %v825
    %v831 = vmul.f32 %v791, %v826
    %v832 = vmul.f32 %v792, %v827
    %v833 = vmul.f32 %v793, %v828
    %v834 = vmul.f32 %v794, %v829
    %v835 = vpack.c.bf16 %v831, %v830
    %v836 = vpack.c.bf16 %v833, %v832
    %v837 = vpack.c.bf16 %v834, %v834
    %s838 = scalar_lea.vmem %s12, 64
    %v839 = vld [vmem:[%s838] sm:$0xf]
    %v840 = vld [vmem:[%s838 + $0x4] sm:$0xf]
    %v841 = vld [vmem:[%s838 + $0x8] sm:$0xf]
    %v842 = vld [vmem:[%s838 + $0xc] sm:$0xf]
    %v843 = vld [vmem:[%s838 + $0x10] sm:$0xf]
    %v844 = vld [vmem:[%s838 + $0x14] sm:$0xf]
    %v845 = vld [vmem:[%s838 + $0x18] sm:$0xf]
    %v846 = vld [vmem:[%s838 + $0x1c] sm:$0xf]
    %v847 = vld [vmem:[%s838 + $0x20] sm:$0xf]
    %v848 = vld [vmem:[%s838 + $0x24] sm:$0xf]
    %v849 = vld [vmem:[%s838 + $0x28] sm:$0xf]
    %v850 = vld [vmem:[%s838 + $0x2c] sm:$0xf]
    %v851 = vld [vmem:[%s838 + $0x30] sm:$0xf]
    %v852 = vld [vmem:[%s838 + $0x34] sm:$0xf]
    %v853 = vld [vmem:[%s838 + $0x38] sm:$0xf]
    %v854 = vld [vmem:[%s838 + $0x3c] sm:$0xf]
    %v855 = vlaneseq
    %v856 = vshrl.u32 %v855, 7
    %v857 = vsub.s32 1, %v856
    %v858 = vrot.slane %v289, %v857
    %v875 = vunpack.c.l.b16 %v839
    %v876 = vunpack.c.l.b16 %v840
    %v877 = vunpack.c.l.b16 %v841
    %v878 = vunpack.c.l.b16 %v842
    %v879 = vunpack.c.l.b16 %v843
    %v880 = vunpack.c.l.b16 %v844
    %v881 = vunpack.c.l.b16 %v845
    %v882 = vunpack.c.l.b16 %v846
    %v883 = vunpack.c.l.b16 %v847
    %v884 = vunpack.c.l.b16 %v848
    %v885 = vunpack.c.l.b16 %v849
    %v886 = vunpack.c.l.b16 %v850
    %v887 = vunpack.c.l.b16 %v851
    %v888 = vunpack.c.l.b16 %v852
    %v889 = vunpack.c.l.b16 %v853
    %v890 = vunpack.c.l.b16 %v854
    %v891 = vpack.c.b16 %v876, %v875
    %v892 = vpack.c.b16 %v878, %v877
    %v893 = vpack.c.b16 %v880, %v879
    %v894 = vpack.c.b16 %v882, %v881
    %v895 = vpack.c.b16 %v884, %v883
    %v896 = vpack.c.b16 %v886, %v885
    %v897 = vpack.c.b16 %v888, %v887
    %v898 = vpack.c.b16 %v890, %v889
    %907 = vmatprep.subr.bf16.mxu0 0
    %908 = vmatpush1.bf16.msra.mxu0 %v891
    %909 = vmatprep.subr.bf16.mxu0 0
    %910 = vmatpush1.bf16.msra.mxu0 %v892
    %911 = vmatprep.subr.bf16.mxu0 0
    %912 = vmatpush1.bf16.msra.mxu0 %v893
    %913 = vmatprep.subr.bf16.mxu0 0
    %914 = vmatpush1.bf16.msra.mxu0 %v894
    %915 = vmatprep.subr.bf16.mxu0 0
    %916 = vmatpush1.bf16.msra.mxu0 %v895
    %917 = vmatprep.subr.bf16.mxu0 0
    %918 = vmatpush1.bf16.msra.mxu0 %v896
    %919 = vmatprep.subr.bf16.mxu0 0
    %920 = vmatpush1.bf16.msra.mxu0 %v897
    %921 = vmatprep.subr.bf16.mxu0 0
    %922 = vmatpush1.bf16.msra.mxu0 %v898
    %923 = vmatprep.subr.bf16.mxu0 0
    %924 = vmatpush1.bf16.msra.mxu0 0
    %925 = vmatprep.subr.bf16.mxu0 0
    %926 = vmatpush1.bf16.msra.mxu0 0
    %927 = vmatprep.subr.bf16.mxu0 0
    %928 = vmatpush1.bf16.msra.mxu0 0
    %929 = vmatprep.subr.bf16.mxu0 0
    %930 = vmatpush1.bf16.msra.mxu0 0
    %931 = vmatprep.subr.bf16.mxu0 0
    %932 = vmatpush1.bf16.msra.mxu0 0
    %933 = vmatprep.subr.bf16.mxu0 0
    %934 = vmatpush1.bf16.msra.mxu0 0
    %935 = vmatprep.subr.bf16.mxu0 0
    %936 = vmatpush1.bf16.msra.mxu0 0
    %937 = vmatprep.subr.bf16.mxu0 0
    %938 = vmatpush1.bf16.msra.mxu0 0
    %939 = vmatprep.mubr.bf16.mxu0 0
    %940 = vmatmul.mubr.bf16.gmra.mrb[0].mxu0 %v835
    %v941 = vpop.f32.mrb[0].mxu0
    %v942 = vadd.f32 %v858, %v941
    %v943 = vpop.f32.mrb[0].mxu0
    %v944 = vpop.f32.mrb[0].mxu0
    %v945 = vadd.f32 %v858, %v944
    %v946 = vpop.f32.mrb[0].mxu0
    %947 = vmatprep.mubr.bf16.mxu0 0
    %948 = vmatmul.mubr.bf16.gmra.mrb[0].mxu0 %v836
    %v949 = vpop.f32.mrb[0].mxu0
    %v950 = vadd.f32 %v858, %v949
    %v951 = vpop.f32.mrb[0].mxu0
    %v952 = vpop.f32.mrb[0].mxu0
    %v953 = vadd.f32 %v858, %v952
    %v954 = vpop.f32.mrb[0].mxu0
    %955 = vmatprep.mubr.bf16.mxu0 0
    %956 = vmatmul.mubr.bf16.gmra.mrb[0].mxu0 %v837
    %v957 = vpop.f32.mrb[0].mxu0
    %v958 = vadd.f32 %v858, %v957
    %v959 = vpop.f32.mrb[0].mxu0
    %v960 = vpop.f32.mrb[0].mxu0
    %v961 = vpop.f32.mrb[0].mxu0
    %962 = vdwg.mxu0
    %v963 = vsel %vm80, %v942, 0.0
    %964 = vadd.xlane.f32.xlu0 %v963
    %v965 = vpop.xlane.xlu0 %964
    %v966 = vsel %vm80, %v945, 0.0
    %967 = vadd.xlane.f32.xlu0 %v966
    %v968 = vpop.xlane.xlu0 %967
    %v969 = vsel %vm80, %v950, 0.0
    %970 = vadd.xlane.f32.xlu0 %v969
    %v971 = vpop.xlane.xlu0 %970
    %v972 = vsel %vm80, %v953, 0.0
    %973 = vadd.xlane.f32.xlu0 %v972
    %v974 = vpop.xlane.xlu0 %973
    %v975 = vsel %vm80, %v958, 0.0
    %976 = vadd.xlane.f32.xlu0 %v975
    %v977 = vpop.xlane.xlu0 %976
    %v978 = vmul.f32 %v965, %v305
    %v979 = vmul.f32 %v968, %v305
    %v980 = vmul.f32 %v971, %v305
    %v981 = vmul.f32 %v974, %v305
    %v982 = vmul.f32 %v977, %v305
    %v983 = vmul.f32 %v942, %v942
    %v984 = vmul.f32 %v945, %v945
    %v985 = vmul.f32 %v950, %v950
    %v986 = vmul.f32 %v953, %v953
    %v987 = vmul.f32 %v958, %v958
    %v988 = vsel %vm80, %v983, 0.0
    %989 = vadd.xlane.f32.xlu0 %v988
    %v990 = vpop.xlane.xlu0 %989
    %v991 = vsel %vm80, %v984, 0.0
    %992 = vadd.xlane.f32.xlu0 %v991
    %v993 = vpop.xlane.xlu0 %992
    %v994 = vsel %vm80, %v985, 0.0
    %995 = vadd.xlane.f32.xlu0 %v994
    %v996 = vpop.xlane.xlu0 %995
    %v997 = vsel %vm80, %v986, 0.0
    %998 = vadd.xlane.f32.xlu0 %v997
    %v999 = vpop.xlane.xlu0 %998
    %v1000 = vsel %vm80, %v987, 0.0
    %1001 = vadd.xlane.f32.xlu0 %v1000
    %v1002 = vpop.xlane.xlu0 %1001
    %v1003 = vmul.f32 %v990, %v305
    %v1004 = vmul.f32 %v993, %v305
    %v1005 = vmul.f32 %v996, %v305
    %v1006 = vmul.f32 %v999, %v305
    %v1007 = vmul.f32 %v1002, %v305
    %v1008 = vsub.f32 %v942, %v978
    %v1009 = vsub.f32 %v945, %v979
    %v1010 = vsub.f32 %v950, %v980
    %v1011 = vsub.f32 %v953, %v981
    %v1012 = vsub.f32 %v958, %v982
    %v1013 = vmul.f32 %v978, %v978
    %v1014 = vmul.f32 %v979, %v979
    %v1015 = vmul.f32 %v980, %v980
    %v1016 = vmul.f32 %v981, %v981
    %v1017 = vmul.f32 %v982, %v982
    %v1018 = vsub.f32 %v1003, %v1013
    %v1019 = vsub.f32 %v1004, %v1014
    %v1020 = vsub.f32 %v1005, %v1015
    %v1021 = vsub.f32 %v1006, %v1016
    %v1022 = vsub.f32 %v1007, %v1017
    %v1023 = vadd.f32 %v1018, 1e-05
    %v1024 = vadd.f32 %v1019, 1e-05
    %v1025 = vadd.f32 %v1020, 1e-05
    %v1026 = vadd.f32 %v1021, 1e-05
    %v1027 = vadd.f32 %v1022, 1e-05
    %v1028 = vrsqrt.pop %v1023
    %v1029 = vrsqrt.pop %v1024
    %v1030 = vrsqrt.pop %v1025
    %v1031 = vrsqrt.pop %v1026
    %v1032 = vrsqrt.pop %v1027
    %v1033 = vmul.f32 %v1008, %v1028
    %v1034 = vmul.f32 %v1009, %v1029
    %v1035 = vmul.f32 %v1010, %v1030
    %v1036 = vmul.f32 %v1011, %v1031
    %v1037 = vmul.f32 %v1012, %v1032
    %v1038 = vpack.c.bf16 %v1034, %v1033
    %v1039 = vpack.c.bf16 %v1036, %v1035
    %v1040 = vpack.c.bf16 %v1037, %v1037
    %s1041 = scalar_lea.vmem %s10, 32
    %v1042 = vld [vmem:[%s1041] sm:$0xf]
    %v1043 = vld [vmem:[%s1041 + $0x4] sm:$0xf]
    %v1044 = vld [vmem:[%s1041 + $0x8] sm:$0xf]
    %v1045 = vld [vmem:[%s1041 + $0xc] sm:$0xf]
    %v1046 = vlaneseq
    %v1047 = vshrl.u32 %v1046, 7
    %v1048 = vsub.s32 2, %v1047
    %v1049 = vrot.slane %v288, %v1048
    %v1054 = vunpack.c.l.b16 %v1042
    %v1055 = vunpack.c.l.b16 %v1043
    %v1056 = vunpack.c.l.b16 %v1044
    %v1057 = vunpack.c.l.b16 %v1045
    %v1058 = vpack.c.b16 %v1055, %v1054
    %v1059 = vpack.c.b16 %v1057, %v1056
    %v1063 = vsel %vm80, %v1038, 0
    %v1066 = vsel %vm80, %v1039, 0
    %v1069 = vsel %vm80, %v1040, 0
    %1071 = vmatprep.subr.bf16.mxu0 0
    %1072 = vmatpush1.bf16.msra.mxu0 %v1058
    %1073 = vmatprep.subr.bf16.mxu0 0
    %1074 = vmatpush1.bf16.msra.mxu0 %v1059
    %1075 = vmatprep.subr.bf16.mxu0 0
    %1076 = vmatpush1.bf16.msra.mxu0 0
    %1077 = vmatprep.subr.bf16.mxu0 0
    %1078 = vmatpush1.bf16.msra.mxu0 0
    %1079 = vmatprep.subr.bf16.mxu0 0
    %1080 = vmatpush1.bf16.msra.mxu0 0
    %1081 = vmatprep.subr.bf16.mxu0 0
    %1082 = vmatpush1.bf16.msra.mxu0 0
    %1083 = vmatprep.subr.bf16.mxu0 0
    %1084 = vmatpush1.bf16.msra.mxu0 0
    %1085 = vmatprep.subr.bf16.mxu0 0
    %1086 = vmatpush1.bf16.msra.mxu0 0
    %1087 = vmatprep.subr.bf16.mxu0 0
    %1088 = vmatpush1.bf16.msra.mxu0 0
    %1089 = vmatprep.subr.bf16.mxu0 0
    %1090 = vmatpush1.bf16.msra.mxu0 0
    %1091 = vmatprep.subr.bf16.mxu0 0
    %1092 = vmatpush1.bf16.msra.mxu0 0
    %1093 = vmatprep.subr.bf16.mxu0 0
    %1094 = vmatpush1.bf16.msra.mxu0 0
    %1095 = vmatprep.subr.bf16.mxu0 0
    %1096 = vmatpush1.bf16.msra.mxu0 0
    %1097 = vmatprep.subr.bf16.mxu0 0
    %1098 = vmatpush1.bf16.msra.mxu0 0
    %1099 = vmatprep.subr.bf16.mxu0 0
    %1100 = vmatpush1.bf16.msra.mxu0 0
    %1101 = vmatprep.subr.bf16.mxu0 0
    %1102 = vmatpush1.bf16.msra.mxu0 0
    %1103 = vmatprep.mubr.bf16.mxu0 0
    %1104 = vmatmul.mubr.bf16.gmra.mrb[0].mxu0 %v1063
    %v1105 = vpop.f32.mrb[0].mxu0
    %v1106 = vadd.f32 %v1049, %v1105
    %v1107 = vpop.f32.mrb[0].mxu0
    %v1108 = vpop.f32.mrb[0].mxu0
    %v1109 = vadd.f32 %v1049, %v1108
    %v1110 = vpop.f32.mrb[0].mxu0
    %1111 = vmatprep.mubr.bf16.mxu0 0
    %1112 = vmatmul.mubr.bf16.gmra.mrb[0].mxu0 %v1066
    %v1113 = vpop.f32.mrb[0].mxu0
    %v1114 = vadd.f32 %v1049, %v1113
    %v1115 = vpop.f32.mrb[0].mxu0
    %v1116 = vpop.f32.mrb[0].mxu0
    %v1117 = vadd.f32 %v1049, %v1116
    %v1118 = vpop.f32.mrb[0].mxu0
    %1119 = vmatprep.mubr.bf16.mxu0 0
    %1120 = vmatmul.mubr.bf16.gmra.mrb[0].mxu0 %v1069
    %v1121 = vpop.f32.mrb[0].mxu0
    %v1122 = vadd.f32 %v1049, %v1121
    %v1123 = vpop.f32.mrb[0].mxu0
    %v1124 = vpop.f32.mrb[0].mxu0
    %v1125 = vpop.f32.mrb[0].mxu0
    %1126 = vdwg.mxu0
    %v1127 = vmul.f32 %v1106, 0.5
    %v1128 = vmul.f32 %v1109, 0.5
    %v1129 = vmul.f32 %v1114, 0.5
    %v1130 = vmul.f32 %v1117, 0.5
    %v1131 = vmul.f32 %v1122, 0.5
    %v1132 = vmul.f32 %v1106, 0.044715
    %v1133 = vmul.f32 %v1109, 0.044715
    %v1134 = vmul.f32 %v1114, 0.044715
    %v1135 = vmul.f32 %v1117, 0.044715
    %v1136 = vmul.f32 %v1122, 0.044715
    %v1137 = vmul.f32 %v1132, %v1106
    %v1138 = vmul.f32 %v1133, %v1109
    %v1139 = vmul.f32 %v1134, %v1114
    %v1140 = vmul.f32 %v1135, %v1117
    %v1141 = vmul.f32 %v1136, %v1122
    %v1142 = vmul.f32 %v1137, %v1106
    %v1143 = vmul.f32 %v1138, %v1109
    %v1144 = vmul.f32 %v1139, %v1114
    %v1145 = vmul.f32 %v1140, %v1117
    %v1146 = vmul.f32 %v1141, %v1122
    %v1147 = vadd.f32 %v1106, %v1142
    %v1148 = vadd.f32 %v1109, %v1143
    %v1149 = vadd.f32 %v1114, %v1144
    %v1150 = vadd.f32 %v1117, %v1145
    %v1151 = vadd.f32 %v1122, %v1146
    %v1152 = vmul.f32 %v1147, 0.7978846
    %v1153 = vmul.f32 %v1148, 0.7978846
    %v1154 = vmul.f32 %v1149, 0.7978846
    %v1155 = vmul.f32 %v1150, 0.7978846
    %v1156 = vmul.f32 %v1151, 0.7978846
    %v1157 = vtanh.pop %v1152
    %v1158 = vtanh.pop %v1153
    %v1159 = vtanh.pop %v1154
    %v1160 = vtanh.pop %v1155
    %v1161 = vtanh.pop %v1156
    %v1162 = vadd.f32 %v1157, 1.0
    %v1163 = vadd.f32 %v1158, 1.0
    %v1164 = vadd.f32 %v1159, 1.0
    %v1165 = vadd.f32 %v1160, 1.0
    %v1166 = vadd.f32 %v1161, 1.0
    %v1167 = vmul.f32 %v1127, %v1162
    %v1168 = vmul.f32 %v1128, %v1163
    %v1169 = vmul.f32 %v1129, %v1164
    %v1170 = vmul.f32 %v1130, %v1165
    %v1171 = vmul.f32 %v1131, %v1166
    %v1172 = vpack.c.bf16 %v1168, %v1167
    %v1173 = vpack.c.bf16 %v1170, %v1169
    %v1174 = vpack.c.bf16 %v1171, %v1171
    %s1175 = scalar_lea.vmem %s12, 128
    %v1176 = vld [vmem:[%s1175] sm:$0xf]
    %v1177 = vld [vmem:[%s1175 + $0x4] sm:$0xf]
    %v1178 = vld [vmem:[%s1175 + $0x8] sm:$0xf]
    %v1179 = vld [vmem:[%s1175 + $0xc] sm:$0xf]
    %v1180 = vld [vmem:[%s1175 + $0x10] sm:$0xf]
    %v1181 = vld [vmem:[%s1175 + $0x14] sm:$0xf]
    %v1182 = vld [vmem:[%s1175 + $0x18] sm:$0xf]
    %v1183 = vld [vmem:[%s1175 + $0x1c] sm:$0xf]
    %v1184 = vld [vmem:[%s1175 + $0x20] sm:$0xf]
    %v1185 = vld [vmem:[%s1175 + $0x24] sm:$0xf]
    %v1186 = vld [vmem:[%s1175 + $0x28] sm:$0xf]
    %v1187 = vld [vmem:[%s1175 + $0x2c] sm:$0xf]
    %v1188 = vld [vmem:[%s1175 + $0x30] sm:$0xf]
    %v1189 = vld [vmem:[%s1175 + $0x34] sm:$0xf]
    %v1190 = vld [vmem:[%s1175 + $0x38] sm:$0xf]
    %v1191 = vld [vmem:[%s1175 + $0x3c] sm:$0xf]
    %v1192 = vlaneseq
    %v1193 = vshrl.u32 %v1192, 7
    %v1194 = vsub.s32 2, %v1193
    %v1195 = vrot.slane %v289, %v1194
    %v1212 = vunpack.c.l.b16 %v1176
    %v1213 = vunpack.c.l.b16 %v1177
    %v1214 = vunpack.c.l.b16 %v1178
    %v1215 = vunpack.c.l.b16 %v1179
    %v1216 = vunpack.c.l.b16 %v1180
    %v1217 = vunpack.c.l.b16 %v1181
    %v1218 = vunpack.c.l.b16 %v1182
    %v1219 = vunpack.c.l.b16 %v1183
    %v1220 = vunpack.c.l.b16 %v1184
    %v1221 = vunpack.c.l.b16 %v1185
    %v1222 = vunpack.c.l.b16 %v1186
    %v1223 = vunpack.c.l.b16 %v1187
    %v1224 = vunpack.c.l.b16 %v1188
    %v1225 = vunpack.c.l.b16 %v1189
    %v1226 = vunpack.c.l.b16 %v1190
    %v1227 = vunpack.c.l.b16 %v1191
    %v1228 = vpack.c.b16 %v1213, %v1212
    %v1229 = vpack.c.b16 %v1215, %v1214
    %v1230 = vpack.c.b16 %v1217, %v1216
    %v1231 = vpack.c.b16 %v1219, %v1218
    %v1232 = vpack.c.b16 %v1221, %v1220
    %v1233 = vpack.c.b16 %v1223, %v1222
    %v1234 = vpack.c.b16 %v1225, %v1224
    %v1235 = vpack.c.b16 %v1227, %v1226
    %1244 = vmatprep.subr.bf16.mxu0 0
    %1245 = vmatpush1.bf16.msra.mxu0 %v1228
    %1246 = vmatprep.subr.bf16.mxu0 0
    %1247 = vmatpush1.bf16.msra.mxu0 %v1229
    %1248 = vmatprep.subr.bf16.mxu0 0
    %1249 = vmatpush1.bf16.msra.mxu0 %v1230
    %1250 = vmatprep.subr.bf16.mxu0 0
    %1251 = vmatpush1.bf16.msra.mxu0 %v1231
    %1252 = vmatprep.subr.bf16.mxu0 0
    %1253 = vmatpush1.bf16.msra.mxu0 %v1232
    %1254 = vmatprep.subr.bf16.mxu0 0
    %1255 = vmatpush1.bf16.msra.mxu0 %v1233
    %1256 = vmatprep.subr.bf16.mxu0 0
    %1257 = vmatpush1.bf16.msra.mxu0 %v1234
    %1258 = vmatprep.subr.bf16.mxu0 0
    %1259 = vmatpush1.bf16.msra.mxu0 %v1235
    %1260 = vmatprep.subr.bf16.mxu0 0
    %1261 = vmatpush1.bf16.msra.mxu0 0
    %1262 = vmatprep.subr.bf16.mxu0 0
    %1263 = vmatpush1.bf16.msra.mxu0 0
    %1264 = vmatprep.subr.bf16.mxu0 0
    %1265 = vmatpush1.bf16.msra.mxu0 0
    %1266 = vmatprep.subr.bf16.mxu0 0
    %1267 = vmatpush1.bf16.msra.mxu0 0
    %1268 = vmatprep.subr.bf16.mxu0 0
    %1269 = vmatpush1.bf16.msra.mxu0 0
    %1270 = vmatprep.subr.bf16.mxu0 0
    %1271 = vmatpush1.bf16.msra.mxu0 0
    %1272 = vmatprep.subr.bf16.mxu0 0
    %1273 = vmatpush1.bf16.msra.mxu0 0
    %1274 = vmatprep.subr.bf16.mxu0 0
    %1275 = vmatpush1.bf16.msra.mxu0 0
    %1276 = vmatprep.mubr.bf16.mxu0 0
    %1277 = vmatmul.mubr.bf16.gmra.mrb[0].mxu0 %v1172
    %v1278 = vpop.f32.mrb[0].mxu0
    %v1279 = vadd.f32 %v1195, %v1278
    %v1280 = vpop.f32.mrb[0].mxu0
    %v1281 = vpop.f32.mrb[0].mxu0
    %v1282 = vadd.f32 %v1195, %v1281
    %v1283 = vpop.f32.mrb[0].mxu0
    %1284 = vmatprep.mubr.bf16.mxu0 0
    %1285 = vmatmul.mubr.bf16.gmra.mrb[0].mxu0 %v1173
    %v1286 = vpop.f32.mrb[0].mxu0
    %v1287 = vadd.f32 %v1195, %v1286
    %v1288 = vpop.f32.mrb[0].mxu0
    %v1289 = vpop.f32.mrb[0].mxu0
    %v1290 = vadd.f32 %v1195, %v1289
    %v1291 = vpop.f32.mrb[0].mxu0
    %1292 = vmatprep.mubr.bf16.mxu0 0
    %1293 = vmatmul.mubr.bf16.gmra.mrb[0].mxu0 %v1174
    %v1294 = vpop.f32.mrb[0].mxu0
    %v1295 = vadd.f32 %v1195, %v1294
    %v1296 = vpop.f32.mrb[0].mxu0
    %v1297 = vpop.f32.mrb[0].mxu0
    %v1298 = vpop.f32.mrb[0].mxu0
    %1299 = vdwg.mxu0
    %v1300 = vsel %vm80, %v1279, 0.0
    %1301 = vadd.xlane.f32.xlu0 %v1300
    %v1302 = vpop.xlane.xlu0 %1301
    %v1303 = vsel %vm80, %v1282, 0.0
    %1304 = vadd.xlane.f32.xlu0 %v1303
    %v1305 = vpop.xlane.xlu0 %1304
    %v1306 = vsel %vm80, %v1287, 0.0
    %1307 = vadd.xlane.f32.xlu0 %v1306
    %v1308 = vpop.xlane.xlu0 %1307
    %v1309 = vsel %vm80, %v1290, 0.0
    %1310 = vadd.xlane.f32.xlu0 %v1309
    %v1311 = vpop.xlane.xlu0 %1310
    %v1312 = vsel %vm80, %v1295, 0.0
    %1313 = vadd.xlane.f32.xlu0 %v1312
    %v1314 = vpop.xlane.xlu0 %1313
    %v1315 = vmul.f32 %v1302, %v305
    %v1316 = vmul.f32 %v1305, %v305
    %v1317 = vmul.f32 %v1308, %v305
    %v1318 = vmul.f32 %v1311, %v305
    %v1319 = vmul.f32 %v1314, %v305
    %v1320 = vmul.f32 %v1279, %v1279
    %v1321 = vmul.f32 %v1282, %v1282
    %v1322 = vmul.f32 %v1287, %v1287
    %v1323 = vmul.f32 %v1290, %v1290
    %v1324 = vmul.f32 %v1295, %v1295
    %v1325 = vsel %vm80, %v1320, 0.0
    %1326 = vadd.xlane.f32.xlu0 %v1325
    %v1327 = vpop.xlane.xlu0 %1326
    %v1328 = vsel %vm80, %v1321, 0.0
    %1329 = vadd.xlane.f32.xlu0 %v1328
    %v1330 = vpop.xlane.xlu0 %1329
    %v1331 = vsel %vm80, %v1322, 0.0
    %1332 = vadd.xlane.f32.xlu0 %v1331
    %v1333 = vpop.xlane.xlu0 %1332
    %v1334 = vsel %vm80, %v1323, 0.0
    %1335 = vadd.xlane.f32.xlu0 %v1334
    %v1336 = vpop.xlane.xlu0 %1335
    %v1337 = vsel %vm80, %v1324, 0.0
    %1338 = vadd.xlane.f32.xlu0 %v1337
    %v1339 = vpop.xlane.xlu0 %1338
    %v1340 = vmul.f32 %v1327, %v305
    %v1341 = vmul.f32 %v1330, %v305
    %v1342 = vmul.f32 %v1333, %v305
    %v1343 = vmul.f32 %v1336, %v305
    %v1344 = vmul.f32 %v1339, %v305
    %v1345 = vsub.f32 %v1279, %v1315
    %v1346 = vsub.f32 %v1282, %v1316
    %v1347 = vsub.f32 %v1287, %v1317
    %v1348 = vsub.f32 %v1290, %v1318
    %v1349 = vsub.f32 %v1295, %v1319
    %v1350 = vmul.f32 %v1315, %v1315
    %v1351 = vmul.f32 %v1316, %v1316
    %v1352 = vmul.f32 %v1317, %v1317
    %v1353 = vmul.f32 %v1318, %v1318
    %v1354 = vmul.f32 %v1319, %v1319
    %v1355 = vsub.f32 %v1340, %v1350
    %v1356 = vsub.f32 %v1341, %v1351
    %v1357 = vsub.f32 %v1342, %v1352
    %v1358 = vsub.f32 %v1343, %v1353
    %v1359 = vsub.f32 %v1344, %v1354
    %v1360 = vadd.f32 %v1355, 1e-05
    %v1361 = vadd.f32 %v1356, 1e-05
    %v1362 = vadd.f32 %v1357, 1e-05
    %v1363 = vadd.f32 %v1358, 1e-05
    %v1364 = vadd.f32 %v1359, 1e-05
    %v1365 = vrsqrt.pop %v1360
    %v1366 = vrsqrt.pop %v1361
    %v1367 = vrsqrt.pop %v1362
    %v1368 = vrsqrt.pop %v1363
    %v1369 = vrsqrt.pop %v1364
    %v1370 = vmul.f32 %v1345, %v1365
    %v1371 = vmul.f32 %v1346, %v1366
    %v1372 = vmul.f32 %v1347, %v1367
    %v1373 = vmul.f32 %v1348, %v1368
    %v1374 = vmul.f32 %v1349, %v1369
    %v1375 = vpack.c.bf16 %v1371, %v1370
    %v1376 = vpack.c.bf16 %v1373, %v1372
    %v1377 = vpack.c.bf16 %v1374, %v1374
    %s1378 = scalar_lea.vmem %s10, 48
    %v1379 = vld [vmem:[%s1378] sm:$0xf]
    %v1380 = vld [vmem:[%s1378 + $0x4] sm:$0xf]
    %v1381 = vld [vmem:[%s1378 + $0x8] sm:$0xf]
    %v1382 = vld [vmem:[%s1378 + $0xc] sm:$0xf]
    %v1383 = vlaneseq
    %v1384 = vshrl.u32 %v1383, 7
    %v1385 = vsub.s32 3, %v1384
    %v1386 = vrot.slane %v288, %v1385
    %v1391 = vunpack.c.l.b16 %v1379
    %v1392 = vunpack.c.l.b16 %v1380
    %v1393 = vunpack.c.l.b16 %v1381
    %v1394 = vunpack.c.l.b16 %v1382
    %v1395 = vpack.c.b16 %v1392, %v1391
    %v1396 = vpack.c.b16 %v1394, %v1393
    %v1400 = vsel %vm80, %v1375, 0
    %v1403 = vsel %vm80, %v1376, 0
    %v1406 = vsel %vm80, %v1377, 0
    %1408 = vmatprep.subr.bf16.mxu0 0
    %1409 = vmatpush1.bf16.msra.mxu0 %v1395
    %1410 = vmatprep.subr.bf16.mxu0 0
    %1411 = vmatpush1.bf16.msra.mxu0 %v1396
    %1412 = vmatprep.subr.bf16.mxu0 0
    %1413 = vmatpush1.bf16.msra.mxu0 0
    %1414 = vmatprep.subr.bf16.mxu0 0
    %1415 = vmatpush1.bf16.msra.mxu0 0
    %1416 = vmatprep.subr.bf16.mxu0 0
    %1417 = vmatpush1.bf16.msra.mxu0 0
    %1418 = vmatprep.subr.bf16.mxu0 0
    %1419 = vmatpush1.bf16.msra.mxu0 0
    %1420 = vmatprep.subr.bf16.mxu0 0
    %1421 = vmatpush1.bf16.msra.mxu0 0
    %1422 = vmatprep.subr.bf16.mxu0 0
    %1423 = vmatpush1.bf16.msra.mxu0 0
    %1424 = vmatprep.subr.bf16.mxu0 0
    %1425 = vmatpush1.bf16.msra.mxu0 0
    %1426 = vmatprep.subr.bf16.mxu0 0
    %1427 = vmatpush1.bf16.msra.mxu0 0
    %1428 = vmatprep.subr.bf16.mxu0 0
    %1429 = vmatpush1.bf16.msra.mxu0 0
    %1430 = vmatprep.subr.bf16.mxu0 0
    %1431 = vmatpush1.bf16.msra.mxu0 0
    %1432 = vmatprep.subr.bf16.mxu0 0
    %1433 = vmatpush1.bf16.msra.mxu0 0
    %1434 = vmatprep.subr.bf16.mxu0 0
    %1435 = vmatpush1.bf16.msra.mxu0 0
    %1436 = vmatprep.subr.bf16.mxu0 0
    %1437 = vmatpush1.bf16.msra.mxu0 0
    %1438 = vmatprep.subr.bf16.mxu0 0
    %1439 = vmatpush1.bf16.msra.mxu0 0
    %1440 = vmatprep.mubr.bf16.mxu0 0
    %1441 = vmatmul.mubr.bf16.gmra.mrb[0].mxu0 %v1400
    %v1442 = vpop.f32.mrb[0].mxu0
    %v1443 = vadd.f32 %v1386, %v1442
    %v1444 = vpop.f32.mrb[0].mxu0
    %v1445 = vpop.f32.mrb[0].mxu0
    %v1446 = vadd.f32 %v1386, %v1445
    %v1447 = vpop.f32.mrb[0].mxu0
    %1448 = vmatprep.mubr.bf16.mxu0 0
    %1449 = vmatmul.mubr.bf16.gmra.mrb[0].mxu0 %v1403
    %v1450 = vpop.f32.mrb[0].mxu0
    %v1451 = vadd.f32 %v1386, %v1450
    %v1452 = vpop.f32.mrb[0].mxu0
    %v1453 = vpop.f32.mrb[0].mxu0
    %v1454 = vadd.f32 %v1386, %v1453
    %v1455 = vpop.f32.mrb[0].mxu0
    %1456 = vmatprep.mubr.bf16.mxu0 0
    %1457 = vmatmul.mubr.bf16.gmra.mrb[0].mxu0 %v1406
    %v1458 = vpop.f32.mrb[0].mxu0
    %v1459 = vadd.f32 %v1386, %v1458
    %v1460 = vpop.f32.mrb[0].mxu0
    %v1461 = vpop.f32.mrb[0].mxu0
    %v1462 = vpop.f32.mrb[0].mxu0
    %1463 = vdwg.mxu0
    %v1464 = vmul.f32 %v1443, 0.5
    %v1465 = vmul.f32 %v1446, 0.5
    %v1466 = vmul.f32 %v1451, 0.5
    %v1467 = vmul.f32 %v1454, 0.5
    %v1468 = vmul.f32 %v1459, 0.5
    %v1469 = vmul.f32 %v1443, 0.044715
    %v1470 = vmul.f32 %v1446, 0.044715
    %v1471 = vmul.f32 %v1451, 0.044715
    %v1472 = vmul.f32 %v1454, 0.044715
    %v1473 = vmul.f32 %v1459, 0.044715
    %v1474 = vmul.f32 %v1469, %v1443
    %v1475 = vmul.f32 %v1470, %v1446
    %v1476 = vmul.f32 %v1471, %v1451
    %v1477 = vmul.f32 %v1472, %v1454
    %v1478 = vmul.f32 %v1473, %v1459
    %v1479 = vmul.f32 %v1474, %v1443
    %v1480 = vmul.f32 %v1475, %v1446
    %v1481 = vmul.f32 %v1476, %v1451
    %v1482 = vmul.f32 %v1477, %v1454
    %v1483 = vmul.f32 %v1478, %v1459
    %v1484 = vadd.f32 %v1443, %v1479
    %v1485 = vadd.f32 %v1446, %v1480
    %v1486 = vadd.f32 %v1451, %v1481
    %v1487 = vadd.f32 %v1454, %v1482
    %v1488 = vadd.f32 %v1459, %v1483
    %v1489 = vmul.f32 %v1484, 0.7978846
    %v1490 = vmul.f32 %v1485, 0.7978846
    %v1491 = vmul.f32 %v1486, 0.7978846
    %v1492 = vmul.f32 %v1487, 0.7978846
    %v1493 = vmul.f32 %v1488, 0.7978846
    %v1494 = vtanh.pop %v1489
    %v1495 = vtanh.pop %v1490
    %v1496 = vtanh.pop %v1491
    %v1497 = vtanh.pop %v1492
    %v1498 = vtanh.pop %v1493
    %v1499 = vadd.f32 %v1494, 1.0
    %v1500 = vadd.f32 %v1495, 1.0
    %v1501 = vadd.f32 %v1496, 1.0
    %v1502 = vadd.f32 %v1497, 1.0
    %v1503 = vadd.f32 %v1498, 1.0
    %v1504 = vmul.f32 %v1464, %v1499
    %v1505 = vmul.f32 %v1465, %v1500
    %v1506 = vmul.f32 %v1466, %v1501
    %v1507 = vmul.f32 %v1467, %v1502
    %v1508 = vmul.f32 %v1468, %v1503
    %v1509 = vpack.c.bf16 %v1505, %v1504
    %v1510 = vpack.c.bf16 %v1507, %v1506
    %v1511 = vpack.c.bf16 %v1508, %v1508
    %s1512 = scalar_lea.vmem %s12, 192
    %v1513 = vld [vmem:[%s1512] sm:$0xf]
    %v1514 = vld [vmem:[%s1512 + $0x4] sm:$0xf]
    %v1515 = vld [vmem:[%s1512 + $0x8] sm:$0xf]
    %v1516 = vld [vmem:[%s1512 + $0xc] sm:$0xf]
    %v1517 = vld [vmem:[%s1512 + $0x10] sm:$0xf]
    %v1518 = vld [vmem:[%s1512 + $0x14] sm:$0xf]
    %v1519 = vld [vmem:[%s1512 + $0x18] sm:$0xf]
    %v1520 = vld [vmem:[%s1512 + $0x1c] sm:$0xf]
    %v1521 = vld [vmem:[%s1512 + $0x20] sm:$0xf]
    %v1522 = vld [vmem:[%s1512 + $0x24] sm:$0xf]
    %v1523 = vld [vmem:[%s1512 + $0x28] sm:$0xf]
    %v1524 = vld [vmem:[%s1512 + $0x2c] sm:$0xf]
    %v1525 = vld [vmem:[%s1512 + $0x30] sm:$0xf]
    %v1526 = vld [vmem:[%s1512 + $0x34] sm:$0xf]
    %v1527 = vld [vmem:[%s1512 + $0x38] sm:$0xf]
    %v1528 = vld [vmem:[%s1512 + $0x3c] sm:$0xf]
    %v1529 = vlaneseq
    %v1530 = vshrl.u32 %v1529, 7
    %v1531 = vsub.s32 3, %v1530
    %v1532 = vrot.slane %v289, %v1531
    %v1549 = vunpack.c.l.b16 %v1513
    %v1550 = vunpack.c.l.b16 %v1514
    %v1551 = vunpack.c.l.b16 %v1515
    %v1552 = vunpack.c.l.b16 %v1516
    %v1553 = vunpack.c.l.b16 %v1517
    %v1554 = vunpack.c.l.b16 %v1518
    %v1555 = vunpack.c.l.b16 %v1519
    %v1556 = vunpack.c.l.b16 %v1520
    %v1557 = vunpack.c.l.b16 %v1521
    %v1558 = vunpack.c.l.b16 %v1522
    %v1559 = vunpack.c.l.b16 %v1523
    %v1560 = vunpack.c.l.b16 %v1524
    %v1561 = vunpack.c.l.b16 %v1525
    %v1562 = vunpack.c.l.b16 %v1526
    %v1563 = vunpack.c.l.b16 %v1527
    %v1564 = vunpack.c.l.b16 %v1528
    %v1565 = vpack.c.b16 %v1550, %v1549
    %v1566 = vpack.c.b16 %v1552, %v1551
    %v1567 = vpack.c.b16 %v1554, %v1553
    %v1568 = vpack.c.b16 %v1556, %v1555
    %v1569 = vpack.c.b16 %v1558, %v1557
    %v1570 = vpack.c.b16 %v1560, %v1559
    %v1571 = vpack.c.b16 %v1562, %v1561
    %v1572 = vpack.c.b16 %v1564, %v1563
    %1581 = vmatprep.subr.bf16.mxu0 0
    %1582 = vmatpush1.bf16.msra.mxu0 %v1565
    %1583 = vmatprep.subr.bf16.mxu0 0
    %1584 = vmatpush1.bf16.msra.mxu0 %v1566
    %1585 = vmatprep.subr.bf16.mxu0 0
    %1586 = vmatpush1.bf16.msra.mxu0 %v1567
    %1587 = vmatprep.subr.bf16.mxu0 0
    %1588 = vmatpush1.bf16.msra.mxu0 %v1568
    %1589 = vmatprep.subr.bf16.mxu0 0
    %1590 = vmatpush1.bf16.msra.mxu0 %v1569
    %1591 = vmatprep.subr.bf16.mxu0 0
    %1592 = vmatpush1.bf16.msra.mxu0 %v1570
    %1593 = vmatprep.subr.bf16.mxu0 0
    %1594 = vmatpush1.bf16.msra.mxu0 %v1571
    %1595 = vmatprep.subr.bf16.mxu0 0
    %1596 = vmatpush1.bf16.msra.mxu0 %v1572
    %1597 = vmatprep.subr.bf16.mxu0 0
    %1598 = vmatpush1.bf16.msra.mxu0 0
    %1599 = vmatprep.subr.bf16.mxu0 0
    %1600 = vmatpush1.bf16.msra.mxu0 0
    %1601 = vmatprep.subr.bf16.mxu0 0
    %1602 = vmatpush1.bf16.msra.mxu0 0
    %1603 = vmatprep.subr.bf16.mxu0 0
    %1604 = vmatpush1.bf16.msra.mxu0 0
    %1605 = vmatprep.subr.bf16.mxu0 0
    %1606 = vmatpush1.bf16.msra.mxu0 0
    %1607 = vmatprep.subr.bf16.mxu0 0
    %1608 = vmatpush1.bf16.msra.mxu0 0
    %1609 = vmatprep.subr.bf16.mxu0 0
    %1610 = vmatpush1.bf16.msra.mxu0 0
    %1611 = vmatprep.subr.bf16.mxu0 0
    %1612 = vmatpush1.bf16.msra.mxu0 0
    %1613 = vmatprep.mubr.bf16.mxu0 0
    %1614 = vmatmul.mubr.bf16.gmra.mrb[0].mxu0 %v1509
    %v1615 = vpop.f32.mrb[0].mxu0
    %v1616 = vadd.f32 %v1532, %v1615
    %v1617 = vpop.f32.mrb[0].mxu0
    %v1618 = vpop.f32.mrb[0].mxu0
    %v1619 = vadd.f32 %v1532, %v1618
    %v1620 = vpop.f32.mrb[0].mxu0
    %1621 = vmatprep.mubr.bf16.mxu0 0
    %1622 = vmatmul.mubr.bf16.gmra.mrb[0].mxu0 %v1510
    %v1623 = vpop.f32.mrb[0].mxu0
    %v1624 = vadd.f32 %v1532, %v1623
    %v1625 = vpop.f32.mrb[0].mxu0
    %v1626 = vpop.f32.mrb[0].mxu0
    %v1627 = vadd.f32 %v1532, %v1626
    %v1628 = vpop.f32.mrb[0].mxu0
    %1629 = vmatprep.mubr.bf16.mxu0 0
    %1630 = vmatmul.mubr.bf16.gmra.mrb[0].mxu0 %v1511
    %v1631 = vpop.f32.mrb[0].mxu0
    %v1632 = vadd.f32 %v1532, %v1631
    %v1633 = vpop.f32.mrb[0].mxu0
    %v1634 = vpop.f32.mrb[0].mxu0
    %v1635 = vpop.f32.mrb[0].mxu0
    %1636 = vdwg.mxu0
    %v1637 = vpack.c.bf16 %v1619, %v1616
    %v1638 = vpack.c.bf16 %v1627, %v1624
    %v1639 = vpack.c.bf16 %v1632, %v1632
    %v1640 = vld [vmem:[%s14] sm:$0xf]
    %v1641 = vld [vmem:[%s14 + $0x4] sm:$0xf]
    %v1642 = vld [vmem:[%s14 + $0x8] sm:$0xf]
    %v1643 = vld [vmem:[%s14 + $0xc] sm:$0xf]
    %v1644 = vld [vmem:[%s15] sm:$0x1]
    %v1646 = vlaneseq
    %v1647 = vshrl.u32 %v1646, 7
    %v1648 = vsub.s32 0, %v1647
    %v1649 = vrot.slane %v1644, %v1648
    %v1655 = vunpack.c.l.b16 %v1640
    %v1656 = vunpack.c.l.b16 %v1641
    %v1657 = vunpack.c.l.b16 %v1642
    %v1658 = vunpack.c.l.b16 %v1643
    %v1659 = vpack.c.b16 %v1656, %v1655
    %v1660 = vpack.c.b16 %v1658, %v1657
    %v1664 = vsel %vm80, %v1637, 0
    %v1667 = vsel %vm80, %v1638, 0
    %v1670 = vsel %vm80, %v1639, 0
    %1672 = vmatprep.subr.bf16.mxu0 0
    %1673 = vmatpush1.bf16.msra.mxu0 %v1659
    %1674 = vmatprep.subr.bf16.mxu0 0
    %1675 = vmatpush1.bf16.msra.mxu0 %v1660
    %1676 = vmatprep.subr.bf16.mxu0 0
    %1677 = vmatpush1.bf16.msra.mxu0 0
    %1678 = vmatprep.subr.bf16.mxu0 0
    %1679 = vmatpush1.bf16.msra.mxu0 0
    %1680 = vmatprep.subr.bf16.mxu0 0
    %1681 = vmatpush1.bf16.msra.mxu0 0
    %1682 = vmatprep.subr.bf16.mxu0 0
    %1683 = vmatpush1.bf16.msra.mxu0 0
    %1684 = vmatprep.subr.bf16.mxu0 0
    %1685 = vmatpush1.bf16.msra.mxu0 0
    %1686 = vmatprep.subr.bf16.mxu0 0
    %1687 = vmatpush1.bf16.msra.mxu0 0
    %1688 = vmatprep.subr.bf16.mxu0 0
    %1689 = vmatpush1.bf16.msra.mxu0 0
    %1690 = vmatprep.subr.bf16.mxu0 0
    %1691 = vmatpush1.bf16.msra.mxu0 0
    %1692 = vmatprep.subr.bf16.mxu0 0
    %1693 = vmatpush1.bf16.msra.mxu0 0
    %1694 = vmatprep.subr.bf16.mxu0 0
    %1695 = vmatpush1.bf16.msra.mxu0 0
    %1696 = vmatprep.subr.bf16.mxu0 0
    %1697 = vmatpush1.bf16.msra.mxu0 0
    %1698 = vmatprep.subr.bf16.mxu0 0
    %1699 = vmatpush1.bf16.msra.mxu0 0
    %1700 = vmatprep.subr.bf16.mxu0 0
    %1701 = vmatpush1.bf16.msra.mxu0 0
    %1702 = vmatprep.subr.bf16.mxu0 0
    %1703 = vmatpush1.bf16.msra.mxu0 0
    %1704 = vmatprep.mubr.bf16.mxu0 0
    %1705 = vmatmul.mubr.bf16.gmra.mrb[0].mxu0 %v1664
    %v1706 = vpop.f32.mrb[0].mxu0
    %v1707 = vadd.f32 %v1649, %v1706
    %v1708 = vpop.f32.mrb[0].mxu0
    %v1709 = vpop.f32.mrb[0].mxu0
    %v1710 = vadd.f32 %v1649, %v1709
    %v1711 = vpop.f32.mrb[0].mxu0
    %1712 = vmatprep.mubr.bf16.mxu0 0
    %1713 = vmatmul.mubr.bf16.gmra.mrb[0].mxu0 %v1667
    %v1714 = vpop.f32.mrb[0].mxu0
    %v1715 = vadd.f32 %v1649, %v1714
    %v1716 = vpop.f32.mrb[0].mxu0
    %v1717 = vpop.f32.mrb[0].mxu0
    %v1718 = vadd.f32 %v1649, %v1717
    %v1719 = vpop.f32.mrb[0].mxu0
    %1720 = vmatprep.mubr.bf16.mxu0 0
    %1721 = vmatmul.mubr.bf16.gmra.mrb[0].mxu0 %v1670
    %v1722 = vpop.f32.mrb[0].mxu0
    %v1723 = vadd.f32 %v1649, %v1722
    %v1724 = vpop.f32.mrb[0].mxu0
    %v1725 = vpop.f32.mrb[0].mxu0
    %v1726 = vpop.f32.mrb[0].mxu0
    %1727 = vdwg.mxu0
    %1728 = vst [vmem:[#allocation3] sm:$0xff] %v1707
    %1729 = vst [vmem:[#allocation3 + $0x8] sm:$0xff] %v1710
    %1730 = vst [vmem:[#allocation3 + $0x10] sm:$0xff] %v1715
    %1731 = vst [vmem:[#allocation3 + $0x18] sm:$0xff] %v1718
    %1732 = vst [vmem:[#allocation3 + $0x20] sm:$0xff] %v1723
    // Predicated region
    $region66: #{tpu_custom_call.1} parent=1 // pred_check
      _
    $region67: #{tpu_custom_call.1} parent=1 // pred_check_branch
      %1734 = sbr.rel (0) target = $region69
    $region68: #{tpu_custom_call.1} parent=1 // pred_region
      %s1736 = ssub.s32 640, 640
      %1737 = vsyncadd [#allocation4], %s1736
      %s1738 = sshll.u32 [#allocation3], 4
      %s1739 = int_to_ptr.vmem [resolvable:$true] %s1738
      %1744 = dma.vmem_to_hbm [thread:$0]  %s1739, 640, %s16, [#allocation4], 128, 128, 8
    $region69: #{tpu_custom_call.1} parent=1 // pred_fallthru
      _
    // Predicated region
    $region70: #{tpu_custom_call.1} parent=1 // pred_check
      _
    $region71: #{tpu_custom_call.1} parent=1 // pred_check_branch
      %1746 = sbr.rel (0) target = $region73
    $region72: #{tpu_custom_call.1} parent=1 // pred_region
      %1747 = dma.done [#allocation4], 640
    $region73: #{tpu_custom_call.1} parent=1 // pred_fallthru
      _
    %1748 = vsyncpa [#allocation4], 1

</llo_original>
